<compile_context>
chip_gen: v5e
topology: v5e:2x2
jax: 0.10.0
libtpu: 0.0.40
codegen_flags: <defaults>
</compile_context>

<pallas_src>
import jax
import jax.numpy as jnp
from jax.experimental import pallas as pl
from jax.experimental.pallas import tpu as pltpu

LEAKY_SLOPE = 0.01   # nn.LeakyReLU default negative_slope
IN_EPS = 1e-5        # nn.InstanceNorm2d default eps


def _round_up(x, m):
    return (x + m - 1) // m * m


def _vmem_tile_bytes(shape, itemsize):
    """Coarse upper bound of one buffer's VMEM footprint ((sublane,lane) tile pad)."""
    s = list(shape)
    s[-1] = _round_up(s[-1], 128)
    if len(s) >= 2:
        sub = 16 if itemsize == 2 else 8
        s[-2] = _round_up(s[-2], sub)
    n = 1
    for d in s:
        n *= d
    return n * itemsize


def _make_down_kernel(hp, wp, cin_p, cpad, cout_s, g0):
    """Fused (conv3x3 -> IN -> LeakyReLU) x 2 for one batch element.

    Layout is channels-major: the input slab is (cin_p, ptot) where column
    `ky*wp + kx + p` holds the tap (ky, kx) for output pixel p (the pooled
    image is height-padded by one zero row and has one zero guard column at
    each end).  Width padding is realized by masking lane-columns where the
    output pixel sits at ox == 0 (kx == 0 taps) / ox == wp-1 (kx == 2 taps).
    The conv1 output is staged in a VMEM slab whose interior starts at the
    128-aligned column `g0`; conv2 reads its taps at `g0 - (wp+1) + ky*wp+kx`.
    """
    P = hp * wp

    def kernel(x_ref, w1_ref, b1_ref, w2_ref, b2_ref, o_ref, mid_ref):
        # Width-padding masks over the output-pixel (lane) axis.
        col = jax.lax.broadcasted_iota(jnp.int32, (1, P), 1) % wp
        mask_l = (col != 0).astype(jnp.bfloat16)          # kx == 0 taps
        mask_r = (col != (wp - 1)).astype(jnp.bfloat16)   # kx == 2 taps

        def masked(tap, kx):
            if kx == 0:
                return tap * mask_l
            if kx == 2:
                return tap * mask_r
            return tap

        def in_lrelu(y):
            # InstanceNorm2d(affine=False), biased variance (PyTorch), two-pass
            # (centered sum of squares -> no E[x^2]-mean^2 cancellation).
            mean = jnp.mean(y, axis=1, keepdims=True)
            yc = y - mean
            var = jnp.mean(yc * yc, axis=1, keepdims=True)
            y = yc * jax.lax.rsqrt(var + IN_EPS)
            return jnp.where(y >= 0, y, LEAKY_SLOPE * y)   # LeakyReLU

        # ---- conv1: one full-depth matmul on an in-register im2col ----------
        taps = []
        for t in range(9):
            ky, kx = divmod(t, 3)
            taps.append(masked(x_ref[0, :, pl.ds(ky * wp + kx, P)], kx))
        im2col = jnp.concatenate(taps, axis=0)              # (9*cin_p, P) bf16
        y1 = jnp.dot(w1_ref[...], im2col,
                     preferred_element_type=jnp.float32) + b1_ref[...]
        y1 = in_lrelu(y1)                                   # (cpad, P) f32

        # ---- stage conv1 output in the zero-bordered VMEM slab ---------------
        # Only the 2*(wp+1) border columns need zeros; the interior is fully
        # overwritten.  (Not hoisted under pl.when(program_id==0): with a
        # "parallel" batch axis each TensorCore owns its own scratch and sees
        # only a subrange of program ids, so init-once would be unsafe.)
        zeros_b = jnp.zeros((cpad, wp + 1), jnp.bfloat16)
        mid_ref[:, pl.ds(g0 - (wp + 1), wp + 1)] = zeros_b
        mid_ref[:, pl.ds(g0 + P, wp + 1)] = zeros_b
        mid_ref[:, pl.ds(g0, P)] = y1.astype(jnp.bfloat16)  # 128-aligned store

        # ---- conv2: 9 taps paired along K -> 256-deep MXU pushes -------------
        base2 = g0 - (wp + 1)

        def tap2(t):
            ky, kx = divmod(t, 3)
            return masked(mid_ref[:, pl.ds(base2 + ky * wp + kx, P)], kx)

        acc = None
        for t0 in range(0, 8, 2):
            lhs = jnp.concatenate([w2_ref[t0], w2_ref[t0 + 1]], axis=1)  # (cpad, 2cpad)
            rhs = jnp.concatenate([tap2(t0), tap2(t0 + 1)], axis=0)      # (2cpad, P)
            d = jnp.dot(lhs, rhs, preferred_element_type=jnp.float32)
            acc = d if acc is None else acc + d
        acc = acc + jnp.dot(w2_ref[8], tap2(8),
                            preferred_element_type=jnp.float32)
        y2 = in_lrelu(acc + b2_ref[...])                    # (cpad, P) f32

        # Emit only the real (sublane-aligned) channel rows, channels-major.
        o_ref[0] = y2[:cout_s, :].astype(o_ref.dtype)

    return kernel


def _pack_w1(w_oihw, cin_p, cpad):
    """PyTorch (Cout, Cin, 3, 3) -> (cpad, 9*cin_p) bf16, im2col-row order."""
    co, ci, kh, kw = w_oihw.shape
    w = jnp.transpose(w_oihw, (0, 2, 3, 1)).reshape(co, kh * kw, ci)
    w = jnp.pad(w, ((0, cpad - co), (0, 0), (0, cin_p - ci)))
    return w.reshape(cpad, kh * kw * cin_p).astype(jnp.bfloat16)


def _pack_w2(w_oihw, cpad):
    """PyTorch (Cout, Cin, 3, 3) -> (9, cpad, cpad) bf16 with [t, out, in]."""
    co, ci, kh, kw = w_oihw.shape
    w = jnp.transpose(w_oihw, (2, 3, 0, 1)).reshape(kh * kw, co, ci)
    w = jnp.pad(w, ((0, 0), (0, cpad - co), (0, cpad - ci)))
    return w.astype(jnp.bfloat16)


def _pack_bias(b, cpad):
    return jnp.pad(b.astype(jnp.float32), (0, cpad - b.shape[0])).reshape(cpad, 1)


def down_forward(x_nchw, params):
    """Down.forward: MaxPool2d(2) then DoubleConv.  I/O is NCHW float32."""
    n, cin, h, w = x_nchw.shape
    cout = params["w1"].shape[0]
    hp, wp = h // 2, w // 2
    P = hp * wp
    cin_p = _round_up(cin, 8)       # small pad: keep input HBM traffic low
    cpad = _round_up(cout, 128)     # MXU M dim / lane-dense weights
    cout_s = _round_up(cout, 8)     # emitted channel rows (sublane aligned)
    ptot = (hp + 2) * wp + 2        # flattened, height-padded + 2 guard cols
    g0 = _round_up(wp + 1, 128)     # 128-aligned interior start of the mid slab
    mid_cols = g0 + P + wp + 1

    # --- XLA prologue glue: 2x2 maxpool + channel/height pads, channels-major
    #     (no layout transpose needed anywhere).  TODO(synk): fold into kernel.
    xp = x_nchw[:, :, :hp * 2, :wp * 2]
    xp = xp.reshape(n, cin, hp, 2, wp, 2).max(axis=(3, 5))        # (n,cin,hp,wp)
    xp = jnp.pad(xp, ((0, 0), (0, cin_p - cin), (1, 1), (0, 0)))  # ch + height pad
    xp = xp.reshape(n, cin_p, (hp + 2) * wp)
    xp = jnp.pad(xp, ((0, 0), (0, 0), (1, 1))).astype(jnp.bfloat16)  # guard cols

    w1 = _pack_w1(params["w1"], cin_p, cpad)     # (cpad, 9*cin_p) bf16
    b1 = _pack_bias(params["b1"], cpad)          # (cpad, 1) f32
    w2 = _pack_w2(params["w2"], cpad)            # (9, cpad, cpad) bf16
    b2 = _pack_bias(params["b2"], cpad)

    # VMEM limit sized to the actual buffers (x2 for double buffering) with
    # headroom for compiler temporaries, capped at v7x's 64 MiB per-TC VMEM.
    vmem_need = (
        2 * (_vmem_tile_bytes((1, cin_p, ptot), 2)
             + _vmem_tile_bytes((cpad, 9 * cin_p), 2)
             + _vmem_tile_bytes((cpad, 1), 4)
             + _vmem_tile_bytes((9, cpad, cpad), 2)
             + _vmem_tile_bytes((cpad, 1), 4)
             + _vmem_tile_bytes((1, cout_s, P), 4))
        + _vmem_tile_bytes((cpad, mid_cols), 2))
    vmem_limit = int(min(max(2 * vmem_need + (8 << 20), 16 << 20), 64 << 20))

    kernel = _make_down_kernel(hp, wp, cin_p, cpad, cout_s, g0)

    out = pl.pallas_call(
        kernel,
        out_shape=jax.ShapeDtypeStruct((n, cout_s, P), jnp.float32),
        grid_spec=pltpu.PrefetchScalarGridSpec(
            num_scalar_prefetch=0,
            grid=(n,),
            in_specs=[
                pl.BlockSpec((1, cin_p, ptot), lambda i: (i, 0, 0)),
                pl.BlockSpec((cpad, 9 * cin_p), lambda i: (0, 0)),
                pl.BlockSpec((cpad, 1), lambda i: (0, 0)),
                pl.BlockSpec((9, cpad, cpad), lambda i: (0, 0, 0)),
                pl.BlockSpec((cpad, 1), lambda i: (0, 0)),
            ],
            out_specs=pl.BlockSpec((1, cout_s, P), lambda i: (i, 0, 0)),
            scratch_shapes=[
                pltpu.VMEM((cpad, mid_cols), jnp.bfloat16),   # conv1 -> conv2 slab
            ],
        ),
        compiler_params=pltpu.CompilerParams(
            dimension_semantics=("parallel",),
            vmem_limit_bytes=vmem_limit),
    )(xp, w1, b1, w2, b2)

    # Tiny epilogue: drop sublane-pad channels, un-flatten spatial (no transpose).
    return out[:, :cout, :].reshape(n, cout, hp, wp)


# --- pure-JAX reference (correctness check only) ---
def _ref_down(x_nchw, params):
    x = jax.lax.reduce_window(x_nchw, -jnp.inf, jax.lax.max,
                              (1, 1, 2, 2), (1, 1, 2, 2), "VALID")

    def block(x, w, b):
        y = jax.lax.conv_general_dilated(
            x, w, (1, 1), ((1, 1), (1, 1)),
            dimension_numbers=("NCHW", "OIHW", "NCHW")) + b[None, :, None, None]
        mean = y.mean(axis=(2, 3), keepdims=True)
        var = jnp.square(y - mean).mean(axis=(2, 3), keepdims=True)
        y = (y - mean) / jnp.sqrt(var + IN_EPS)
        return jnp.where(y >= 0, y, LEAKY_SLOPE * y)

    x = block(x, params["w1"], params["b1"])
    x = block(x, params["w2"], params["b2"])
    return x


if __name__ == "__main__":
    key = jax.random.PRNGKey(0)
    k1, k2, k3, k4, kx = jax.random.split(key, 5)

    in_c, out_c = 4, 8
    batch, spatial = 2, 16

    # Deterministic synthetic parameters (shapes from Down(in_c, out_c).__init__)
    params = {
        "w1": jax.random.normal(k1, (out_c, in_c, 3, 3), jnp.float32) * 0.1,
        "b1": jax.random.normal(k2, (out_c,), jnp.float32) * 0.1,
        "w2": jax.random.normal(k3, (out_c, out_c, 3, 3), jnp.float32) * 0.1,
        "b2": jax.random.normal(k4, (out_c,), jnp.float32) * 0.1,
    }
    x = jax.random.normal(kx, (batch, in_c, spatial, spatial), jnp.float32)

    y = jax.jit(down_forward)(x, params)
    y = jax.block_until_ready(y)

    assert y.shape == (batch, out_c, spatial // 2, spatial // 2), y.shape
    y_ref = _ref_down(x, params)
    # bf16 MXU operands -> slightly looser tolerance than a pure-f32 check.
    assert jnp.allclose(y, y_ref, rtol=5e-2, atol=5e-2), (
        "mismatch vs reference, max abs diff = "
        f"{float(jnp.max(jnp.abs(y - y_ref)))}")

    print("KERNEL_OK")
</pallas_src>

<mosaic_0001>
module attributes {stable_mosaic.version = 11 : i64} {
  func.func @kernel(%arg0: i32, %arg1: memref<1x8x82xbf16, #tpu.memory_space<vmem>>, %arg2: memref<128x72xbf16, #tpu.memory_space<vmem>>, %arg3: memref<128x1xf32, #tpu.memory_space<vmem>>, %arg4: memref<9x128x128xbf16, #tpu.memory_space<vmem>>, %arg5: memref<128x1xf32, #tpu.memory_space<vmem>>, %arg6: memref<1x8x64xf32, #tpu.memory_space<vmem>>, %arg7: memref<128x201xbf16, #tpu.memory_space<vmem>>) attributes {dimension_semantics = [#tpu.dimension_semantics<parallel>], iteration_bounds = array<i64: 2>, scalar_prefetch = 0 : i64, scratch_operands = 1 : i64, tpu.core_type = #tpu.core_type<tc>, window_params = [{transform_indices = @transform_0, window_bounds = array<i64: 1, 8, 82>}, {pipeline_mode = #tpu.pipeline_mode<synchronous>, transform_indices = @transform_1, window_bounds = array<i64: 128, 72>}, {pipeline_mode = #tpu.pipeline_mode<synchronous>, transform_indices = @transform_2, window_bounds = array<i64: 128, 1>}, {pipeline_mode = #tpu.pipeline_mode<synchronous>, transform_indices = @transform_3, window_bounds = array<i64: 9, 128, 128>}, {pipeline_mode = #tpu.pipeline_mode<synchronous>, transform_indices = @transform_4, window_bounds = array<i64: 128, 1>}, {transform_indices = @transform_5, window_bounds = array<i64: 1, 8, 64>}]} {
    %0 = tpu.iota {dimensions = array<i32: 1>} : vector<1x64xi32>
    %c8_i32 = arith.constant 8 : i32
    %c0_i32 = arith.constant 0 : i32
    %1 = arith.cmpi eq, %c8_i32, %c0_i32 : i32
    %c1_i32 = arith.constant 1 : i32
    %2 = arith.select %1, %c1_i32, %c8_i32 : i32
    %3 = vector.broadcast %2 : i32 to vector<1x64xi32>
    %4 = arith.remsi %0, %3 : vector<1x64xi32>
    %c0_i32_0 = arith.constant 0 : i32
    %5 = vector.broadcast %c0_i32_0 : i32 to vector<1x64xi32>
    %6 = arith.cmpi ne, %4, %5 : vector<1x64xi32>
    %c0_i32_1 = arith.constant 0 : i32
    %7 = vector.broadcast %c0_i32_1 : i32 to vector<1x64xi32>
    %8 = arith.cmpi slt, %4, %7 : vector<1x64xi32>
    %c0_i32_2 = arith.constant 0 : i32
    %9 = arith.cmpi slt, %2, %c0_i32_2 : i32
    %10 = vector.broadcast %9 : i1 to vector<1x64xi1>
    %11 = vector.broadcast %10 : vector<1x64xi1> to vector<1x64xi1>
    %12 = arith.xori %8, %11 : vector<1x64xi1>
    %13 = arith.andi %12, %6 : vector<1x64xi1>
    %14 = vector.broadcast %2 : i32 to vector<1x64xi32>
    %15 = arith.addi %4, %14 : vector<1x64xi32>
    %16 = arith.select %13, %15, %4 : vector<1x64xi1>, vector<1x64xi32>
    %c0_i32_3 = arith.constant 0 : i32
    %17 = vector.broadcast %c0_i32_3 : i32 to vector<1x64xi32>
    %18 = arith.cmpi ne, %16, %17 : vector<1x64xi32>
    %19 = arith.extui %18 : vector<1x64xi1> to vector<1x64xi32>
    %20 = arith.sitofp %19 : vector<1x64xi32> to vector<1x64xf32>
    %21 = arith.truncf %20 : vector<1x64xf32> to vector<1x64xbf16>
    %c7_i32 = arith.constant 7 : i32
    %22 = vector.broadcast %c7_i32 : i32 to vector<1x64xi32>
    %23 = arith.cmpi ne, %16, %22 : vector<1x64xi32>
    %24 = arith.extui %23 : vector<1x64xi1> to vector<1x64xi32>
    %25 = arith.sitofp %24 : vector<1x64xi32> to vector<1x64xf32>
    %26 = arith.truncf %25 : vector<1x64xf32> to vector<1x64xbf16>
    %c0 = arith.constant 0 : index
    %c0_4 = arith.constant 0 : index
    %c0_5 = arith.constant 0 : index
    %27 = vector.load %arg1[%c0, %c0_4, %c0_5] : memref<1x8x82xbf16, #tpu.memory_space<vmem>>, vector<1x8x64xbf16>
    %28 = vector.shape_cast %27 : vector<1x8x64xbf16> to vector<8x64xbf16>
    %29 = vector.broadcast %21 : vector<1x64xbf16> to vector<8x64xbf16>
    %30 = arith.mulf %28, %29 : vector<8x64xbf16>
    %c0_6 = arith.constant 0 : index
    %c0_7 = arith.constant 0 : index
    %c1 = arith.constant 1 : index
    %31 = vector.load %arg1[%c0_6, %c0_7, %c1] : memref<1x8x82xbf16, #tpu.memory_space<vmem>>, vector<1x8x64xbf16>
    %32 = vector.shape_cast %31 : vector<1x8x64xbf16> to vector<8x64xbf16>
    %c0_8 = arith.constant 0 : index
    %c0_9 = arith.constant 0 : index
    %c2 = arith.constant 2 : index
    %33 = vector.load %arg1[%c0_8, %c0_9, %c2] : memref<1x8x82xbf16, #tpu.memory_space<vmem>>, vector<1x8x64xbf16>
    %34 = vector.shape_cast %33 : vector<1x8x64xbf16> to vector<8x64xbf16>
    %35 = vector.broadcast %26 : vector<1x64xbf16> to vector<8x64xbf16>
    %36 = arith.mulf %34, %35 : vector<8x64xbf16>
    %c0_10 = arith.constant 0 : index
    %c0_11 = arith.constant 0 : index
    %c8 = arith.constant 8 : index
    %37 = vector.load %arg1[%c0_10, %c0_11, %c8] : memref<1x8x82xbf16, #tpu.memory_space<vmem>>, vector<1x8x64xbf16>
    %38 = vector.shape_cast %37 : vector<1x8x64xbf16> to vector<8x64xbf16>
    %39 = vector.broadcast %21 : vector<1x64xbf16> to vector<8x64xbf16>
    %40 = arith.mulf %38, %39 : vector<8x64xbf16>
    %c0_12 = arith.constant 0 : index
    %c0_13 = arith.constant 0 : index
    %c9 = arith.constant 9 : index
    %41 = vector.load %arg1[%c0_12, %c0_13, %c9] : memref<1x8x82xbf16, #tpu.memory_space<vmem>>, vector<1x8x64xbf16>
    %42 = vector.shape_cast %41 : vector<1x8x64xbf16> to vector<8x64xbf16>
    %c0_14 = arith.constant 0 : index
    %c0_15 = arith.constant 0 : index
    %c10 = arith.constant 10 : index
    %43 = vector.load %arg1[%c0_14, %c0_15, %c10] : memref<1x8x82xbf16, #tpu.memory_space<vmem>>, vector<1x8x64xbf16>
    %44 = vector.shape_cast %43 : vector<1x8x64xbf16> to vector<8x64xbf16>
    %45 = vector.broadcast %26 : vector<1x64xbf16> to vector<8x64xbf16>
    %46 = arith.mulf %44, %45 : vector<8x64xbf16>
    %c0_16 = arith.constant 0 : index
    %c0_17 = arith.constant 0 : index
    %c16 = arith.constant 16 : index
    %47 = vector.load %arg1[%c0_16, %c0_17, %c16] : memref<1x8x82xbf16, #tpu.memory_space<vmem>>, vector<1x8x64xbf16>
    %48 = vector.shape_cast %47 : vector<1x8x64xbf16> to vector<8x64xbf16>
    %49 = vector.broadcast %21 : vector<1x64xbf16> to vector<8x64xbf16>
    %50 = arith.mulf %48, %49 : vector<8x64xbf16>
    %c0_18 = arith.constant 0 : index
    %c0_19 = arith.constant 0 : index
    %c17 = arith.constant 17 : index
    %51 = vector.load %arg1[%c0_18, %c0_19, %c17] : memref<1x8x82xbf16, #tpu.memory_space<vmem>>, vector<1x8x64xbf16>
    %52 = vector.shape_cast %51 : vector<1x8x64xbf16> to vector<8x64xbf16>
    %c0_20 = arith.constant 0 : index
    %c0_21 = arith.constant 0 : index
    %c18 = arith.constant 18 : index
    %53 = vector.load %arg1[%c0_20, %c0_21, %c18] : memref<1x8x82xbf16, #tpu.memory_space<vmem>>, vector<1x8x64xbf16>
    %54 = vector.shape_cast %53 : vector<1x8x64xbf16> to vector<8x64xbf16>
    %55 = vector.broadcast %26 : vector<1x64xbf16> to vector<8x64xbf16>
    %56 = arith.mulf %54, %55 : vector<8x64xbf16>
    %57 = tpu.concatenate %30, %32, %36, %40, %42, %46, %50, %52, %56 in 0 : vector<8x64xbf16>, vector<8x64xbf16>, vector<8x64xbf16>, vector<8x64xbf16>, vector<8x64xbf16>, vector<8x64xbf16>, vector<8x64xbf16>, vector<8x64xbf16>, vector<8x64xbf16> -> vector<72x64xbf16>
    %c0_22 = arith.constant 0 : index
    %c0_23 = arith.constant 0 : index
    %58 = vector.load %arg2[%c0_22, %c0_23] : memref<128x72xbf16, #tpu.memory_space<vmem>>, vector<128x72xbf16>
    %cst = arith.constant dense<0.000000e+00> : vector<128x64xf32>
    %59 = tpu.matmul %58, %57, %cst {dimension_numbers = #tpu.dot_dimension_numbers<[1], [0], [0], [1], [0, 0, 1, 1], [], []>} : vector<128x72xbf16>, vector<72x64xbf16>, vector<128x64xf32> -> vector<128x64xf32>
    %c0_24 = arith.constant 0 : index
    %c0_25 = arith.constant 0 : index
    %60 = vector.load %arg3[%c0_24, %c0_25] : memref<128x1xf32, #tpu.memory_space<vmem>>, vector<128x1xf32>
    %61 = vector.broadcast %60 : vector<128x1xf32> to vector<128x64xf32>
    %62 = arith.addf %59, %61 : vector<128x64xf32>
    %cst_26 = arith.constant dense<0.000000e+00> : vector<128xf32>
    %63 = vector.multi_reduction <add>, %62, %cst_26 [1] : vector<128x64xf32> to vector<128xf32>
    %64 = vector.shape_cast %63 : vector<128xf32> to vector<128x1xf32>
    %cst_27 = arith.constant 6.400000e+01 : f32
    %65 = vector.broadcast %cst_27 : f32 to vector<128x1xf32>
    %66 = arith.divf %64, %65 : vector<128x1xf32>
    %67 = vector.broadcast %66 : vector<128x1xf32> to vector<128x64xf32>
    %68 = arith.subf %62, %67 : vector<128x64xf32>
    %69 = arith.mulf %68, %68 : vector<128x64xf32>
    %cst_28 = arith.constant dense<0.000000e+00> : vector<128xf32>
    %70 = vector.multi_reduction <add>, %69, %cst_28 [1] : vector<128x64xf32> to vector<128xf32>
    %71 = vector.shape_cast %70 : vector<128xf32> to vector<128x1xf32>
    %cst_29 = arith.constant 6.400000e+01 : f32
    %72 = vector.broadcast %cst_29 : f32 to vector<128x1xf32>
    %73 = arith.divf %71, %72 : vector<128x1xf32>
    %cst_30 = arith.constant 9.99999974E-6 : f32
    %74 = vector.broadcast %cst_30 : f32 to vector<128x1xf32>
    %75 = arith.addf %73, %74 : vector<128x1xf32>
    %76 = math.rsqrt %75 : vector<128x1xf32>
    %77 = vector.broadcast %76 : vector<128x1xf32> to vector<128x64xf32>
    %78 = arith.mulf %68, %77 : vector<128x64xf32>
    %cst_31 = arith.constant 0.000000e+00 : f32
    %79 = vector.broadcast %cst_31 : f32 to vector<128x64xf32>
    %80 = arith.cmpf oge, %78, %79 : vector<128x64xf32>
    %cst_32 = arith.constant 0.00999999977 : f32
    %81 = vector.broadcast %cst_32 : f32 to vector<128x64xf32>
    %82 = arith.mulf %81, %78 : vector<128x64xf32>
    %83 = arith.select %80, %78, %82 : vector<128x64xi1>, vector<128x64xf32>
    %cst_33 = arith.constant 0.000000e+00 : bf16
    %84 = vector.broadcast %cst_33 : bf16 to vector<128x9xbf16>
    %c0_34 = arith.constant 0 : index
    %c119 = arith.constant 119 : index
    %85 = vector.load %arg7[%c0_34, %c119] : memref<128x201xbf16, #tpu.memory_space<vmem>>, vector<128x9xbf16>
    tpu.vector_store %arg7[%c0_34, %c119], %84 {strides = array<i32>} : memref<128x201xbf16, #tpu.memory_space<vmem>>, vector<128x9xbf16>,
    %c0_35 = arith.constant 0 : index
    %c192 = arith.constant 192 : index
    %86 = vector.load %arg7[%c0_35, %c192] : memref<128x201xbf16, #tpu.memory_space<vmem>>, vector<128x9xbf16>
    tpu.vector_store %arg7[%c0_35, %c192], %84 {strides = array<i32>} : memref<128x201xbf16, #tpu.memory_space<vmem>>, vector<128x9xbf16>,
    %87 = arith.truncf %83 : vector<128x64xf32> to vector<128x64xbf16>
    %c0_36 = arith.constant 0 : index
    %c128 = arith.constant 128 : index
    %88 = vector.load %arg7[%c0_36, %c128] : memref<128x201xbf16, #tpu.memory_space<vmem>>, vector<128x64xbf16>
    tpu.vector_store %arg7[%c0_36, %c128], %87 {strides = array<i32>} : memref<128x201xbf16, #tpu.memory_space<vmem>>, vector<128x64xbf16>,
    %c0_37 = arith.constant 0 : index
    %c0_38 = arith.constant 0 : index
    %c0_39 = arith.constant 0 : index
    %89 = vector.load %arg4[%c0_37, %c0_38, %c0_39] : memref<9x128x128xbf16, #tpu.memory_space<vmem>>, vector<1x128x128xbf16>
    %90 = vector.shape_cast %89 : vector<1x128x128xbf16> to vector<128x128xbf16>
    %c1_40 = arith.constant 1 : index
    %c0_41 = arith.constant 0 : index
    %c0_42 = arith.constant 0 : index
    %91 = vector.load %arg4[%c1_40, %c0_41, %c0_42] : memref<9x128x128xbf16, #tpu.memory_space<vmem>>, vector<1x128x128xbf16>
    %92 = vector.shape_cast %91 : vector<1x128x128xbf16> to vector<128x128xbf16>
    %93 = tpu.concatenate %90, %92 in 1 : vector<128x128xbf16>, vector<128x128xbf16> -> vector<128x256xbf16>
    %c0_43 = arith.constant 0 : index
    %c119_44 = arith.constant 119 : index
    %94 = vector.load %arg7[%c0_43, %c119_44] : memref<128x201xbf16, #tpu.memory_space<vmem>>, vector<128x64xbf16>
    %95 = vector.broadcast %21 : vector<1x64xbf16> to vector<128x64xbf16>
    %96 = arith.mulf %94, %95 : vector<128x64xbf16>
    %c0_45 = arith.constant 0 : index
    %c120 = arith.constant 120 : index
    %97 = vector.load %arg7[%c0_45, %c120] : memref<128x201xbf16, #tpu.memory_space<vmem>>, vector<128x64xbf16>
    %98 = tpu.concatenate %96, %97 in 0 : vector<128x64xbf16>, vector<128x64xbf16> -> vector<256x64xbf16>
    %cst_46 = arith.constant dense<0.000000e+00> : vector<128x64xf32>
    %99 = tpu.matmul %93, %98, %cst_46 {dimension_numbers = #tpu.dot_dimension_numbers<[1], [0], [0], [1], [0, 0, 1, 1], [], []>} : vector<128x256xbf16>, vector<256x64xbf16>, vector<128x64xf32> -> vector<128x64xf32>
    %c2_47 = arith.constant 2 : index
    %c0_48 = arith.constant 0 : index
    %c0_49 = arith.constant 0 : index
    %100 = vector.load %arg4[%c2_47, %c0_48, %c0_49] : memref<9x128x128xbf16, #tpu.memory_space<vmem>>, vector<1x128x128xbf16>
    %101 = vector.shape_cast %100 : vector<1x128x128xbf16> to vector<128x128xbf16>
    %c3 = arith.constant 3 : index
    %c0_50 = arith.constant 0 : index
    %c0_51 = arith.constant 0 : index
    %102 = vector.load %arg4[%c3, %c0_50, %c0_51] : memref<9x128x128xbf16, #tpu.memory_space<vmem>>, vector<1x128x128xbf16>
    %103 = vector.shape_cast %102 : vector<1x128x128xbf16> to vector<128x128xbf16>
    %104 = tpu.concatenate %101, %103 in 1 : vector<128x128xbf16>, vector<128x128xbf16> -> vector<128x256xbf16>
    %c0_52 = arith.constant 0 : index
    %c121 = arith.constant 121 : index
    %105 = vector.load %arg7[%c0_52, %c121] : memref<128x201xbf16, #tpu.memory_space<vmem>>, vector<128x64xbf16>
    %106 = vector.broadcast %26 : vector<1x64xbf16> to vector<128x64xbf16>
    %107 = arith.mulf %105, %106 : vector<128x64xbf16>
    %c0_53 = arith.constant 0 : index
    %c127 = arith.constant 127 : index
    %108 = vector.load %arg7[%c0_53, %c127] : memref<128x201xbf16, #tpu.memory_space<vmem>>, vector<128x64xbf16>
    %109 = vector.broadcast %21 : vector<1x64xbf16> to vector<128x64xbf16>
    %110 = arith.mulf %108, %109 : vector<128x64xbf16>
    %111 = tpu.concatenate %107, %110 in 0 : vector<128x64xbf16>, vector<128x64xbf16> -> vector<256x64xbf16>
    %cst_54 = arith.constant dense<0.000000e+00> : vector<128x64xf32>
    %112 = tpu.matmul %104, %111, %cst_54 {dimension_numbers = #tpu.dot_dimension_numbers<[1], [0], [0], [1], [0, 0, 1, 1], [], []>} : vector<128x256xbf16>, vector<256x64xbf16>, vector<128x64xf32> -> vector<128x64xf32>
    %113 = arith.addf %99, %112 : vector<128x64xf32>
    %c4 = arith.constant 4 : index
    %c0_55 = arith.constant 0 : index
    %c0_56 = arith.constant 0 : index
    %114 = vector.load %arg4[%c4, %c0_55, %c0_56] : memref<9x128x128xbf16, #tpu.memory_space<vmem>>, vector<1x128x128xbf16>
    %115 = vector.shape_cast %114 : vector<1x128x128xbf16> to vector<128x128xbf16>
    %c5 = arith.constant 5 : index
    %c0_57 = arith.constant 0 : index
    %c0_58 = arith.constant 0 : index
    %116 = vector.load %arg4[%c5, %c0_57, %c0_58] : memref<9x128x128xbf16, #tpu.memory_space<vmem>>, vector<1x128x128xbf16>
    %117 = vector.shape_cast %116 : vector<1x128x128xbf16> to vector<128x128xbf16>
    %118 = tpu.concatenate %115, %117 in 1 : vector<128x128xbf16>, vector<128x128xbf16> -> vector<128x256xbf16>
    %c0_59 = arith.constant 0 : index
    %c128_60 = arith.constant 128 : index
    %119 = vector.load %arg7[%c0_59, %c128_60] : memref<128x201xbf16, #tpu.memory_space<vmem>>, vector<128x64xbf16>
    %c0_61 = arith.constant 0 : index
    %c129 = arith.constant 129 : index
    %120 = vector.load %arg7[%c0_61, %c129] : memref<128x201xbf16, #tpu.memory_space<vmem>>, vector<128x64xbf16>
    %121 = vector.broadcast %26 : vector<1x64xbf16> to vector<128x64xbf16>
    %122 = arith.mulf %120, %121 : vector<128x64xbf16>
    %123 = tpu.concatenate %119, %122 in 0 : vector<128x64xbf16>, vector<128x64xbf16> -> vector<256x64xbf16>
    %cst_62 = arith.constant dense<0.000000e+00> : vector<128x64xf32>
    %124 = tpu.matmul %118, %123, %cst_62 {dimension_numbers = #tpu.dot_dimension_numbers<[1], [0], [0], [1], [0, 0, 1, 1], [], []>} : vector<128x256xbf16>, vector<256x64xbf16>, vector<128x64xf32> -> vector<128x64xf32>
    %125 = arith.addf %113, %124 : vector<128x64xf32>
    %c6 = arith.constant 6 : index
    %c0_63 = arith.constant 0 : index
    %c0_64 = arith.constant 0 : index
    %126 = vector.load %arg4[%c6, %c0_63, %c0_64] : memref<9x128x128xbf16, #tpu.memory_space<vmem>>, vector<1x128x128xbf16>
    %127 = vector.shape_cast %126 : vector<1x128x128xbf16> to vector<128x128xbf16>
    %c7 = arith.constant 7 : index
    %c0_65 = arith.constant 0 : index
    %c0_66 = arith.constant 0 : index
    %128 = vector.load %arg4[%c7, %c0_65, %c0_66] : memref<9x128x128xbf16, #tpu.memory_space<vmem>>, vector<1x128x128xbf16>
    %129 = vector.shape_cast %128 : vector<1x128x128xbf16> to vector<128x128xbf16>
    %130 = tpu.concatenate %127, %129 in 1 : vector<128x128xbf16>, vector<128x128xbf16> -> vector<128x256xbf16>
    %c0_67 = arith.constant 0 : index
    %c135 = arith.constant 135 : index
    %131 = vector.load %arg7[%c0_67, %c135] : memref<128x201xbf16, #tpu.memory_space<vmem>>, vector<128x64xbf16>
    %132 = vector.broadcast %21 : vector<1x64xbf16> to vector<128x64xbf16>
    %133 = arith.mulf %131, %132 : vector<128x64xbf16>
    %c0_68 = arith.constant 0 : index
    %c136 = arith.constant 136 : index
    %134 = vector.load %arg7[%c0_68, %c136] : memref<128x201xbf16, #tpu.memory_space<vmem>>, vector<128x64xbf16>
    %135 = tpu.concatenate %133, %134 in 0 : vector<128x64xbf16>, vector<128x64xbf16> -> vector<256x64xbf16>
    %cst_69 = arith.constant dense<0.000000e+00> : vector<128x64xf32>
    %136 = tpu.matmul %130, %135, %cst_69 {dimension_numbers = #tpu.dot_dimension_numbers<[1], [0], [0], [1], [0, 0, 1, 1], [], []>} : vector<128x256xbf16>, vector<256x64xbf16>, vector<128x64xf32> -> vector<128x64xf32>
    %137 = arith.addf %125, %136 : vector<128x64xf32>
    %c8_70 = arith.constant 8 : index
    %c0_71 = arith.constant 0 : index
    %c0_72 = arith.constant 0 : index
    %138 = vector.load %arg4[%c8_70, %c0_71, %c0_72] : memref<9x128x128xbf16, #tpu.memory_space<vmem>>, vector<1x128x128xbf16>
    %139 = vector.shape_cast %138 : vector<1x128x128xbf16> to vector<128x128xbf16>
    %c0_73 = arith.constant 0 : index
    %c137 = arith.constant 137 : index
    %140 = vector.load %arg7[%c0_73, %c137] : memref<128x201xbf16, #tpu.memory_space<vmem>>, vector<128x64xbf16>
    %141 = vector.broadcast %26 : vector<1x64xbf16> to vector<128x64xbf16>
    %142 = arith.mulf %140, %141 : vector<128x64xbf16>
    %cst_74 = arith.constant dense<0.000000e+00> : vector<128x64xf32>
    %143 = tpu.matmul %139, %142, %cst_74 {dimension_numbers = #tpu.dot_dimension_numbers<[1], [0], [0], [1], [0, 0, 1, 1], [], []>} : vector<128x128xbf16>, vector<128x64xbf16>, vector<128x64xf32> -> vector<128x64xf32>
    %144 = arith.addf %137, %143 : vector<128x64xf32>
    %c0_75 = arith.constant 0 : index
    %c0_76 = arith.constant 0 : index
    %145 = vector.load %arg5[%c0_75, %c0_76] : memref<128x1xf32, #tpu.memory_space<vmem>>, vector<128x1xf32>
    %146 = vector.broadcast %145 : vector<128x1xf32> to vector<128x64xf32>
    %147 = arith.addf %144, %146 : vector<128x64xf32>
    %cst_77 = arith.constant dense<0.000000e+00> : vector<128xf32>
    %148 = vector.multi_reduction <add>, %147, %cst_77 [1] : vector<128x64xf32> to vector<128xf32>
    %149 = vector.shape_cast %148 : vector<128xf32> to vector<128x1xf32>
    %cst_78 = arith.constant 6.400000e+01 : f32
    %150 = vector.broadcast %cst_78 : f32 to vector<128x1xf32>
    %151 = arith.divf %149, %150 : vector<128x1xf32>
    %152 = vector.broadcast %151 : vector<128x1xf32> to vector<128x64xf32>
    %153 = arith.subf %147, %152 : vector<128x64xf32>
    %154 = arith.mulf %153, %153 : vector<128x64xf32>
    %cst_79 = arith.constant dense<0.000000e+00> : vector<128xf32>
    %155 = vector.multi_reduction <add>, %154, %cst_79 [1] : vector<128x64xf32> to vector<128xf32>
    %156 = vector.shape_cast %155 : vector<128xf32> to vector<128x1xf32>
    %cst_80 = arith.constant 6.400000e+01 : f32
    %157 = vector.broadcast %cst_80 : f32 to vector<128x1xf32>
    %158 = arith.divf %156, %157 : vector<128x1xf32>
    %cst_81 = arith.constant 9.99999974E-6 : f32
    %159 = vector.broadcast %cst_81 : f32 to vector<128x1xf32>
    %160 = arith.addf %158, %159 : vector<128x1xf32>
    %161 = math.rsqrt %160 : vector<128x1xf32>
    %162 = vector.broadcast %161 : vector<128x1xf32> to vector<128x64xf32>
    %163 = arith.mulf %153, %162 : vector<128x64xf32>
    %cst_82 = arith.constant 0.000000e+00 : f32
    %164 = vector.broadcast %cst_82 : f32 to vector<128x64xf32>
    %165 = arith.cmpf oge, %163, %164 : vector<128x64xf32>
    %cst_83 = arith.constant 0.00999999977 : f32
    %166 = vector.broadcast %cst_83 : f32 to vector<128x64xf32>
    %167 = arith.mulf %166, %163 : vector<128x64xf32>
    %168 = arith.select %165, %163, %167 : vector<128x64xi1>, vector<128x64xf32>
    %169 = vector.extract_strided_slice %168 {offsets = [0, 0], sizes = [8, 64], strides = [1, 1]} : vector<128x64xf32> to vector<8x64xf32>
    %c0_84 = arith.constant 0 : index
    %c0_85 = arith.constant 0 : index
    %c0_86 = arith.constant 0 : index
    %170 = vector.load %arg6[%c0_84, %c0_85, %c0_86] : memref<1x8x64xf32, #tpu.memory_space<vmem>>, vector<1x8x64xf32>
    %171 = vector.shape_cast %170 : vector<1x8x64xf32> to vector<8x64xf32>
    %172 = vector.shape_cast %169 : vector<8x64xf32> to vector<1x8x64xf32>
    tpu.vector_store %arg6[%c0_84, %c0_85, %c0_86], %172 {strides = array<i32>} : memref<1x8x64xf32, #tpu.memory_space<vmem>>, vector<1x8x64xf32>,
    return
  }
  func.func @transform_0(%arg0: i32) -> (i32, i32, i32) {
    %c0_i32 = arith.constant 0 : i32
    %c0_i32_0 = arith.constant 0 : i32
    %c0_i32_1 = arith.constant 0 : i32
    return %arg0, %c0_i32, %c0_i32_0 : i32, i32, i32
  }
  func.func @transform_1(%arg0: i32) -> (i32, i32) {
    %c0_i32 = arith.constant 0 : i32
    %c0_i32_0 = arith.constant 0 : i32
    %c0_i32_1 = arith.constant 0 : i32
    return %c0_i32, %c0_i32_0 : i32, i32
  }
  func.func @transform_2(%arg0: i32) -> (i32, i32) {
    %c0_i32 = arith.constant 0 : i32
    %c0_i32_0 = arith.constant 0 : i32
    %c0_i32_1 = arith.constant 0 : i32
    return %c0_i32, %c0_i32_0 : i32, i32
  }
  func.func @transform_3(%arg0: i32) -> (i32, i32, i32) {
    %c0_i32 = arith.constant 0 : i32
    %c0_i32_0 = arith.constant 0 : i32
    %c0_i32_1 = arith.constant 0 : i32
    %c0_i32_2 = arith.constant 0 : i32
    return %c0_i32, %c0_i32_0, %c0_i32_1 : i32, i32, i32
  }
  func.func @transform_4(%arg0: i32) -> (i32, i32) {
    %c0_i32 = arith.constant 0 : i32
    %c0_i32_0 = arith.constant 0 : i32
    %c0_i32_1 = arith.constant 0 : i32
    return %c0_i32, %c0_i32_0 : i32, i32
  }
  func.func @transform_5(%arg0: i32) -> (i32, i32, i32) {
    %c0_i32 = arith.constant 0 : i32
    %c0_i32_0 = arith.constant 0 : i32
    %c0_i32_1 = arith.constant 0 : i32
    return %arg0, %c0_i32, %c0_i32_0 : i32, i32, i32
  }
}

</mosaic_0001>

<llo_original>
// kernel: down_forward.1
$region0: #{down_forward.1}
  #allocation0 [shape = 'u32[]', space=smem, size = 0x4, offset = 0x4, fixed_abs, tag = 'smem constant byte address 0x4 - core index']
  #allocation1 [shape = 'u32[72,128]{1,0:T(1,128)}', space=vmem, size = 0x9000, scoped, tag = 'internal scratch']
  #allocation2 [shape = 'bf16[128,201]{1,0:T(8,128)(2,1)}', space=vmem, size = 0x10000, scoped, tag = 'scratch operand']
  %s0 = inlined_call_operand.vmem [shape: bf16[2,8,82], index: 0, kind: input, shape index: {}]
  %s1 = inlined_call_operand.vmem [shape: bf16[128,72], index: 1, kind: input, shape index: {}]
  %s2 = inlined_call_operand.vmem [shape: f32[128,1], index: 2, kind: input, shape index: {}]
  %s3 = inlined_call_operand.vmem [shape: bf16[9,128,128], index: 3, kind: input, shape index: {}]
  %s4 = inlined_call_operand.vmem [shape: f32[128,1], index: 4, kind: input, shape index: {}]
  %s5 = inlined_call_operand.vmem [shape: f32[2,8,64], index: 5, kind: output, shape index: {}]
  %s6 = sld [smem:[#allocation0]]
  $region53: #{down_forward.1} parent=0
    _
  %s8 = ssub.s32 1, %s6
  %s9 = scalar_select 0, %s8, %s6
  loop: start=0, step=1, limit=4
  $region2: #{down_forward.1} parent=0 // loop_pre_header
    _
  $region3: #{down_forward.1} parent=0 // loop_header
    %s11 = sphi 0, %s15
    %p12 = scmp.ge.s32.totalorder %s11, 4
    %s21 = sphi 0, %s23
    %s24 = sphi 0, %s21
    %s25 = sphi 0, %s24
    %s41 = sphi 0, %s25
    %s45 = sphi 0, %s45
    %s47 = sphi 0, %s45
    %s48 = sphi 0, %s47
    %s62 = sphi 0, %s48
    %s66 = sphi 0, %s66
    %s68 = sphi 0, %s66
    %s69 = sphi 0, %s68
    %s83 = sphi 0, %s69
    %s87 = sphi 0, %s87
    %s89 = sphi 0, %s87
    %s90 = sphi 0, %s89
    %s104 = sphi 0, %s90
    %s108 = sphi 0, %s108
    %s110 = sphi 0, %s108
    %s111 = sphi 0, %s110
    %s125 = sphi 0, %s111
    %s131 = sphi 0, %s133
    %s134 = sphi 0, %s131
    %s135 = sphi 0, %s134
    %s151 = sphi 0, %s135
  $region4: #{down_forward.1} parent=0 // loop_header_branch
    %14 = sbr.rel (%p12) target = $region8
  $region5: #{down_forward.1} parent=0 // loop_body
    %s16 = ssub.s32 %s11, 1
    %s17 = ssub.s32 %s11, 2
    %s18 = sadd.s32 %s11, 1
    %s19 = ssub.s32 %s11, %s18
    %p20 = scmp.eq.s32.totalorder %s19, 0
    %s22 = sadd.s32 %s21, 1
    %s23 = scalar_select %p20, %s21, %s22
    %p26 = pneg %p20
    %p27 = scmp.eq.s32.totalorder %s11, 1
    %p28 = por %p26, %p27
    %p29 = scmp.ne.s32.totalorder %s21, %s24
    %p30 = scmp.eq.s32.totalorder %s11, 0
    %p31 = por %p29, %p30
    %p32 = scmp.ne.s32.totalorder %s21, %s24
    %p33 = scmp.eq.s32.totalorder %s16, 1
    %p34 = por %p32, %p33
    %p35 = scmp.ne.s32.totalorder %s24, %s25
    %p36 = scmp.eq.s32.totalorder %s16, 0
    %p37 = por %p35, %p36
    %p38 = scmp.ne.s32.totalorder %s24, %s25
    %p39 = scmp.eq.s32.totalorder %s17, 1
    %p40 = por %p38, %p39
    %p42 = scmp.ne.s32.totalorder %s25, %s41
    %p43 = scmp.eq.s32.totalorder %s17, 0
    %p44 = por %p42, %p43
    %s46 = sadd.s32 %s45, 1
    %p49 = scmp.eq.s32.totalorder %s11, 1
    %p50 = scmp.ne.s32.totalorder %s45, %s47
    %p51 = scmp.eq.s32.totalorder %s11, 0
    %p52 = por %p50, %p51
    %p53 = scmp.ne.s32.totalorder %s45, %s47
    %p54 = scmp.eq.s32.totalorder %s16, 1
    %p55 = por %p53, %p54
    %p56 = scmp.ne.s32.totalorder %s47, %s48
    %p57 = scmp.eq.s32.totalorder %s16, 0
    %p58 = por %p56, %p57
    %p59 = scmp.ne.s32.totalorder %s47, %s48
    %p60 = scmp.eq.s32.totalorder %s17, 1
    %p61 = por %p59, %p60
    %p63 = scmp.ne.s32.totalorder %s48, %s62
    %p64 = scmp.eq.s32.totalorder %s17, 0
    %p65 = por %p63, %p64
    %s67 = sadd.s32 %s66, 1
    %p70 = scmp.eq.s32.totalorder %s11, 1
    %p71 = scmp.ne.s32.totalorder %s66, %s68
    %p72 = scmp.eq.s32.totalorder %s11, 0
    %p73 = por %p71, %p72
    %p74 = scmp.ne.s32.totalorder %s66, %s68
    %p75 = scmp.eq.s32.totalorder %s16, 1
    %p76 = por %p74, %p75
    %p77 = scmp.ne.s32.totalorder %s68, %s69
    %p78 = scmp.eq.s32.totalorder %s16, 0
    %p79 = por %p77, %p78
    %p80 = scmp.ne.s32.totalorder %s68, %s69
    %p81 = scmp.eq.s32.totalorder %s17, 1
    %p82 = por %p80, %p81
    %p84 = scmp.ne.s32.totalorder %s69, %s83
    %p85 = scmp.eq.s32.totalorder %s17, 0
    %p86 = por %p84, %p85
    %s88 = sadd.s32 %s87, 1
    %p91 = scmp.eq.s32.totalorder %s11, 1
    %p92 = scmp.ne.s32.totalorder %s87, %s89
    %p93 = scmp.eq.s32.totalorder %s11, 0
    %p94 = por %p92, %p93
    %p95 = scmp.ne.s32.totalorder %s87, %s89
    %p96 = scmp.eq.s32.totalorder %s16, 1
    %p97 = por %p95, %p96
    %p98 = scmp.ne.s32.totalorder %s89, %s90
    %p99 = scmp.eq.s32.totalorder %s16, 0
    %p100 = por %p98, %p99
    %p101 = scmp.ne.s32.totalorder %s89, %s90
    %p102 = scmp.eq.s32.totalorder %s17, 1
    %p103 = por %p101, %p102
    %p105 = scmp.ne.s32.totalorder %s90, %s104
    %p106 = scmp.eq.s32.totalorder %s17, 0
    %p107 = por %p105, %p106
    %s109 = sadd.s32 %s108, 1
    %p112 = scmp.eq.s32.totalorder %s11, 1
    %p113 = scmp.ne.s32.totalorder %s108, %s110
    %p114 = scmp.eq.s32.totalorder %s11, 0
    %p115 = por %p113, %p114
    %p116 = scmp.ne.s32.totalorder %s108, %s110
    %p117 = scmp.eq.s32.totalorder %s16, 1
    %p118 = por %p116, %p117
    %p119 = scmp.ne.s32.totalorder %s110, %s111
    %p120 = scmp.eq.s32.totalorder %s16, 0
    %p121 = por %p119, %p120
    %p122 = scmp.ne.s32.totalorder %s110, %s111
    %p123 = scmp.eq.s32.totalorder %s17, 1
    %p124 = por %p122, %p123
    %p126 = scmp.ne.s32.totalorder %s111, %s125
    %p127 = scmp.eq.s32.totalorder %s17, 0
    %p128 = por %p126, %p127
    %s129 = ssub.s32 %s11, %s18
    %p130 = scmp.eq.s32.totalorder %s129, 0
    %s132 = sadd.s32 %s131, 1
    %s133 = scalar_select %p130, %s131, %s132
    %p136 = pneg %p130
    %p137 = scmp.eq.s32.totalorder %s11, 1
    %p138 = por %p136, %p137
    %p139 = scmp.ne.s32.totalorder %s131, %s134
    %p140 = scmp.eq.s32.totalorder %s11, 0
    %p141 = por %p139, %p140
    %p142 = scmp.ne.s32.totalorder %s131, %s134
    %p143 = scmp.eq.s32.totalorder %s16, 1
    %p144 = por %p142, %p143
    %p145 = scmp.ne.s32.totalorder %s134, %s135
    %p146 = scmp.eq.s32.totalorder %s16, 0
    %p147 = por %p145, %p146
    %p148 = scmp.ne.s32.totalorder %s134, %s135
    %p149 = scmp.eq.s32.totalorder %s17, 1
    %p150 = por %p148, %p149
    %p152 = scmp.ne.s32.totalorder %s135, %s151
    %p153 = scmp.eq.s32.totalorder %s17, 0
    %p154 = por %p152, %p153
    %p155 = scmp.le.s32.totalorder 1, %s11
    %p156 = scmp.lt.s32.totalorder %s11, 3
    %p157 = pnand %p155, %p156
    %p158 = pneg %p157
    // Predicated region
    $region9: #{down_forward.1} parent=5 // pred_check
      _
    $region10: #{down_forward.1} parent=5 // pred_check_branch
      %160 = sbr.rel (%p157) target = $region12
    $region11: #{down_forward.1} parent=5 // pred_region
      %s161 = ssub.s32 %s11, 1
      // Predicated region
      $region13: #{down_forward.1} parent=11 // pred_check
        %p162 = pneg %p58
      $region14: #{down_forward.1} parent=11 // pred_check_branch
        %164 = sbr.rel (%p162) target = $region16
      $region15: #{down_forward.1} parent=11 // pred_region
        _
      $region16: #{down_forward.1} parent=11 // pred_fallthru
        _
      // Predicated region
      $region17: #{down_forward.1} parent=11 // pred_check
        %p165 = pneg %p79
      $region18: #{down_forward.1} parent=11 // pred_check_branch
        %167 = sbr.rel (%p165) target = $region20
      $region19: #{down_forward.1} parent=11 // pred_region
        _
      $region20: #{down_forward.1} parent=11 // pred_fallthru
        _
      // Predicated region
      $region21: #{down_forward.1} parent=11 // pred_check
        %p168 = pneg %p100
      $region22: #{down_forward.1} parent=11 // pred_check_branch
        %170 = sbr.rel (%p168) target = $region24
      $region23: #{down_forward.1} parent=11 // pred_region
        _
      $region24: #{down_forward.1} parent=11 // pred_fallthru
        _
      // Predicated region
      $region25: #{down_forward.1} parent=11 // pred_check
        %p171 = pneg %p121
      $region26: #{down_forward.1} parent=11 // pred_check_branch
        %173 = sbr.rel (%p171) target = $region28
      $region27: #{down_forward.1} parent=11 // pred_region
        _
      $region28: #{down_forward.1} parent=11 // pred_fallthru
        _
    $region12: #{down_forward.1} parent=5 // pred_fallthru
      _
    %p174 = scmp.lt.s32.totalorder %s11, 2
    // Predicated region
    $region29: #{down_forward.1} parent=5 // pred_check
      %p175 = pneg %p174
    $region30: #{down_forward.1} parent=5 // pred_check_branch
      %177 = sbr.rel (%p175) target = $region32
    $region31: #{down_forward.1} parent=5 // pred_region
      // Predicated region
      $region33: #{down_forward.1} parent=31 // pred_check
        %p178 = pneg %p31
      $region34: #{down_forward.1} parent=31 // pred_check_branch
        %180 = sbr.rel (%p178) target = $region36
      $region35: #{down_forward.1} parent=31 // pred_region
        %p181 = scmp.lt.s32.totalorder %s11, 1
        %s182 = scalar_select %p181, %s11, 1
        %s183 = smul.addr %s182, 4
        %s184 = scalar_lea.vmem %s0, %s183
      $region36: #{down_forward.1} parent=31 // pred_fallthru
        _
    $region32: #{down_forward.1} parent=5 // pred_fallthru
      _
    %p185 = scmp.le.s32.totalorder 1, %s11
    %p186 = scmp.lt.s32.totalorder %s11, 3
    %p187 = pnand %p185, %p186
    %p188 = pneg %p187
    // Predicated region
    $region37: #{down_forward.1} parent=5 // pred_check
      _
    $region38: #{down_forward.1} parent=5 // pred_check_branch
      %190 = sbr.rel (%p187) target = $region40
    $region39: #{down_forward.1} parent=5 // pred_region
      %s191 = ssub.s32 %s11, 1
      %p192 = scmp.lt.s32.totalorder %s16, 1
      %s193 = scalar_select %p192, %s16, 1
      %s194 = smul.addr %s193, 4
      %s195 = scalar_lea.vmem %s0, %s194
      %p196 = pneg %p37
      %p197 = pneg %p34
      %p198 = pneg %p58
      %p199 = pneg %p55
      %p200 = pneg %p79
      %p201 = pneg %p76
      %p202 = pneg %p100
      %p203 = pneg %p97
      %p204 = pneg %p121
      %p205 = pneg %p118
      %p206 = pneg %p147
      %p207 = pneg %p144
      %p208 = scmp.lt.s32.totalorder %s16, 1
      %s209 = scalar_select %p208, %s16, 1
      %s210 = smul.addr %s209, 8
      %s211 = scalar_lea.vmem %s5, %s210
      %p212 = scmp.lt.s32.totalorder %s16, 1
      %s213 = scalar_select %p212, %s16, 1
      %s214 = smul.addr %s213, 4
      %s215 = scalar_lea.vmem %s0, %s214
      %p216 = scmp.lt.s32.totalorder %s16, 1
      %s217 = scalar_select %p216, %s16, 1
      %s218 = smul.addr %s217, 8
      %s219 = scalar_lea.vmem %s5, %s218
      %v221 = vlaneseq
      %v222 = vand.u32 %v221, 127
      %vm223 = vcmp.lt.s32.totalorder %v222, 0
      %v224 = vsub.s32 0, %v222
      %v225 = vsel %vm223, %v224, %v222
      %v226 = vshrl.u32 %v225, 3
      %v227 = vand.u32 %v225, 7
      %v228 = vsub.s32 0, %v227
      %v229 = vsel %vm223, %v228, %v227
      %vm230 = vcmp.ne.s32.totalorder %v229, 0
      %vm231 = vcmp.lt.s32.totalorder %v229, 0
      %vm232 = vmand %vm231, %vm230
      %v233 = vadd.s32 %v229, 8
      %v234 = vsel %vm232, %v233, %v229
      %vm235 = vcmp.ne.s32.totalorder %v234, 0
      %v236 = vsel %vm235, 1, 0
      %v237 = vcvt.s32.f32 %v236
      %v238 = vpack.c.bf16 %v237, %v237
      %vm239 = vcmp.ne.s32.totalorder %v234, 7
      %v240 = vsel %vm239, 1, 0
      %v241 = vcvt.s32.f32 %v240
      %v242 = vpack.c.bf16 %v241, %v241
      %v243 = vld [vmem:[%s215] sm:$0xf]
      %v244 = vunpack.c.l.bf16 %v243
      %v245 = vunpack.c.l.bf16 %v238
      %v246 = vmul.f32 %v244, %v245
      %v247 = vpack.c.bf16 %v246, %v246
      %v248 = vunpack.c.l.bf16 %v242
      %250 = vrot.lane.b32.xlu0 %v248, 2
      %v251 = vpop.permute.xlu0 %250
      %v253 = vmul.f32 %v244, %v251
      %v254 = vpack.c.bf16 %v253, %v253
      %256 = vrot.lane.b32.xlu0 %v245, 8
      %v257 = vpop.permute.xlu0 %256
      %v259 = vmul.f32 %v244, %v257
      %v260 = vpack.c.bf16 %v259, %v259
      %261 = vrot.lane.b32.xlu0 %v248, 10
      %v262 = vpop.permute.xlu0 %261
      %v264 = vmul.f32 %v244, %v262
      %v265 = vpack.c.bf16 %v264, %v264
      %266 = vrot.lane.b32.xlu0 %v245, 16
      %v267 = vpop.permute.xlu0 %266
      %v269 = vmul.f32 %v244, %v267
      %v270 = vpack.c.bf16 %v269, %v269
      %271 = vrot.lane.b32.xlu0 %v248, 18
      %v272 = vpop.permute.xlu0 %271
      %v274 = vmul.f32 %v244, %v272
      %v275 = vpack.c.bf16 %v274, %v274
      %v277 = vunpack.c.l.b16 %v243
      %v278 = vpack.c.b16 %v277, %v277
      %279 = vrot.lane.b32.xlu0 %v278, 127
      %v280 = vpop.permute.xlu0 %279
      %v282 = vunpack.c.l.b16 %v254
      %v283 = vpack.c.b16 %v282, %v282
      %284 = vrot.lane.b32.xlu0 %v283, 126
      %v285 = vpop.permute.xlu0 %284
      %v287 = vunpack.c.l.b16 %v260
      %v288 = vpack.c.b16 %v287, %v287
      %289 = vrot.lane.b32.xlu0 %v288, 120
      %v290 = vpop.permute.xlu0 %289
      %291 = vrot.lane.b32.xlu0 %v278, 119
      %v292 = vpop.permute.xlu0 %291
      %v294 = vunpack.c.l.b16 %v265
      %v295 = vpack.c.b16 %v294, %v294
      %296 = vrot.lane.b32.xlu0 %v295, 118
      %v297 = vpop.permute.xlu0 %296
      %v299 = vunpack.c.l.b16 %v270
      %v300 = vpack.c.b16 %v299, %v299
      %301 = vrot.lane.b32.xlu0 %v300, 112
      %v302 = vpop.permute.xlu0 %301
      %303 = vrot.lane.b32.xlu0 %v278, 111
      %v304 = vpop.permute.xlu0 %303
      %v306 = vunpack.c.l.b16 %v275
      %v307 = vpack.c.b16 %v306, %v306
      %308 = vrot.lane.b32.xlu0 %v307, 110
      %v309 = vpop.permute.xlu0 %308
      %vm310 = vcmask 1043456
      %v313 = vsel %vm310, %v247, %v280
      %v317 = vsel %vm310, %v285, %v290
      %v321 = vsel %vm310, %v292, %v297
      %v325 = vsel %vm310, %v302, %v304
      %v327 = vld [vmem:[%s1] sm:$0xf]
      %v328 = vld [vmem:[%s1 + $0x4] sm:$0xf]
      %v329 = vld [vmem:[%s1 + $0x8] sm:$0xf]
      %v330 = vld [vmem:[%s1 + $0xc] sm:$0xf]
      %v331 = vld [vmem:[%s1 + $0x10] sm:$0xf]
      %v332 = vld [vmem:[%s1 + $0x14] sm:$0xf]
      %v333 = vld [vmem:[%s1 + $0x18] sm:$0xf]
      %v334 = vld [vmem:[%s1 + $0x1c] sm:$0xf]
      %v335 = vld [vmem:[%s1 + $0x20] sm:$0xf]
      %v336 = vld [vmem:[%s1 + $0x24] sm:$0xf]
      %v337 = vld [vmem:[%s1 + $0x28] sm:$0xf]
      %v338 = vld [vmem:[%s1 + $0x2c] sm:$0xf]
      %v339 = vld [vmem:[%s1 + $0x30] sm:$0xf]
      %v340 = vld [vmem:[%s1 + $0x34] sm:$0xf]
      %v341 = vld [vmem:[%s1 + $0x38] sm:$0xf]
      %v342 = vld [vmem:[%s1 + $0x3c] sm:$0xf]
      %v343 = vld [vmem:[%s2] sm:$0xff]
      %v344 = vld [vmem:[%s2 + $0x8] sm:$0xff]
      %v345 = vld [vmem:[%s2 + $0x10] sm:$0xff]
      %v346 = vld [vmem:[%s2 + $0x18] sm:$0xff]
      %v347 = vld [vmem:[%s2 + $0x20] sm:$0xff]
      %v348 = vld [vmem:[%s2 + $0x28] sm:$0xff]
      %v349 = vld [vmem:[%s2 + $0x30] sm:$0xff]
      %v350 = vld [vmem:[%s2 + $0x38] sm:$0xff]
      %v351 = vld [vmem:[%s2 + $0x40] sm:$0xff]
      %v352 = vld [vmem:[%s2 + $0x48] sm:$0xff]
      %v353 = vld [vmem:[%s2 + $0x50] sm:$0xff]
      %v354 = vld [vmem:[%s2 + $0x58] sm:$0xff]
      %v355 = vld [vmem:[%s2 + $0x60] sm:$0xff]
      %v356 = vld [vmem:[%s2 + $0x68] sm:$0xff]
      %v357 = vld [vmem:[%s2 + $0x70] sm:$0xff]
      %v358 = vld [vmem:[%s2 + $0x78] sm:$0xff]
      %360 = vset.pattern.permute.xlu0 0
      %361 = vperm.xlu0 %360, %v343
      %v362 = vpop.permute.xlu0 %361
      %365 = vset.pattern.permute.xlu0 0
      %366 = vperm.xlu0 %365, %v344
      %v367 = vpop.permute.xlu0 %366
      %370 = vset.pattern.permute.xlu0 0
      %371 = vperm.xlu0 %370, %v345
      %v372 = vpop.permute.xlu0 %371
      %375 = vset.pattern.permute.xlu0 0
      %376 = vperm.xlu0 %375, %v346
      %v377 = vpop.permute.xlu0 %376
      %380 = vset.pattern.permute.xlu0 0
      %381 = vperm.xlu0 %380, %v347
      %v382 = vpop.permute.xlu0 %381
      %385 = vset.pattern.permute.xlu0 0
      %386 = vperm.xlu0 %385, %v348
      %v387 = vpop.permute.xlu0 %386
      %390 = vset.pattern.permute.xlu0 0
      %391 = vperm.xlu0 %390, %v349
      %v392 = vpop.permute.xlu0 %391
      %395 = vset.pattern.permute.xlu0 0
      %396 = vperm.xlu0 %395, %v350
      %v397 = vpop.permute.xlu0 %396
      %400 = vset.pattern.permute.xlu0 0
      %401 = vperm.xlu0 %400, %v351
      %v402 = vpop.permute.xlu0 %401
      %405 = vset.pattern.permute.xlu0 0
      %406 = vperm.xlu0 %405, %v352
      %v407 = vpop.permute.xlu0 %406
      %410 = vset.pattern.permute.xlu0 0
      %411 = vperm.xlu0 %410, %v353
      %v412 = vpop.permute.xlu0 %411
      %415 = vset.pattern.permute.xlu0 0
      %416 = vperm.xlu0 %415, %v354
      %v417 = vpop.permute.xlu0 %416
      %420 = vset.pattern.permute.xlu0 0
      %421 = vperm.xlu0 %420, %v355
      %v422 = vpop.permute.xlu0 %421
      %425 = vset.pattern.permute.xlu0 0
      %426 = vperm.xlu0 %425, %v356
      %v427 = vpop.permute.xlu0 %426
      %430 = vset.pattern.permute.xlu0 0
      %431 = vperm.xlu0 %430, %v357
      %v432 = vpop.permute.xlu0 %431
      %435 = vset.pattern.permute.xlu0 0
      %436 = vperm.xlu0 %435, %v358
      %v437 = vpop.permute.xlu0 %436
      %v455 = vunpack.c.l.b16 %v327
      %v456 = vunpack.c.l.b16 %v328
      %v457 = vunpack.c.l.b16 %v329
      %v458 = vunpack.c.l.b16 %v330
      %v459 = vunpack.c.l.b16 %v331
      %v460 = vunpack.c.l.b16 %v332
      %v461 = vunpack.c.l.b16 %v333
      %v462 = vunpack.c.l.b16 %v334
      %v463 = vunpack.c.l.b16 %v335
      %v464 = vunpack.c.l.b16 %v336
      %v465 = vunpack.c.l.b16 %v337
      %v466 = vunpack.c.l.b16 %v338
      %v467 = vunpack.c.l.b16 %v339
      %v468 = vunpack.c.l.b16 %v340
      %v469 = vunpack.c.l.b16 %v341
      %v470 = vunpack.c.l.b16 %v342
      %v471 = vpack.c.b16 %v456, %v455
      %v472 = vpack.c.b16 %v458, %v457
      %v473 = vpack.c.b16 %v460, %v459
      %v474 = vpack.c.b16 %v462, %v461
      %v475 = vpack.c.b16 %v464, %v463
      %v476 = vpack.c.b16 %v466, %v465
      %v477 = vpack.c.b16 %v468, %v467
      %v478 = vpack.c.b16 %v470, %v469
      %vm479 = vcmask 588800
      %v481 = vsel %vm479, %v471, 0
      %v484 = vsel %vm479, %v472, 0
      %v487 = vsel %vm479, %v473, 0
      %v490 = vsel %vm479, %v474, 0
      %v493 = vsel %vm479, %v475, 0
      %v496 = vsel %vm479, %v476, 0
      %v499 = vsel %vm479, %v477, 0
      %v502 = vsel %vm479, %v478, 0
      %v505 = vsel %vm310, %v309, 0
      %507 = vmatpush.bf16.msra.mxu0 0
      %508 = vmatpush.bf16.msra.mxu0 0
      %509 = vmatpush.bf16.msra.mxu0 0
      %510 = vmatpush.bf16.msra.mxu0 %v505
      %511 = vmatpush.bf16.msra.mxu0 %v325
      %512 = vmatpush.bf16.msra.mxu0 %v321
      %513 = vmatpush.bf16.msra.mxu0 %v317
      %514 = vmatpush.bf16.msra.mxu0 %v313
      %515 = vmatmul.bf16.gmra.mxu0 %v481
      %v516 = vpop.f32.mrf.mxu0
      %v517 = vadd.f32 %v362, %v516
      %v518 = vpop.f32.mrf.mxu0
      %v519 = vadd.f32 %v367, %v518
      %520 = vmatmul.bf16.gmra.mxu0 %v484
      %v521 = vpop.f32.mrf.mxu0
      %v522 = vadd.f32 %v372, %v521
      %v523 = vpop.f32.mrf.mxu0
      %v524 = vadd.f32 %v377, %v523
      %525 = vmatmul.bf16.gmra.mxu0 %v487
      %v526 = vpop.f32.mrf.mxu0
      %v527 = vadd.f32 %v382, %v526
      %v528 = vpop.f32.mrf.mxu0
      %v529 = vadd.f32 %v387, %v528
      %530 = vmatmul.bf16.gmra.mxu0 %v490
      %v531 = vpop.f32.mrf.mxu0
      %v532 = vadd.f32 %v392, %v531
      %v533 = vpop.f32.mrf.mxu0
      %v534 = vadd.f32 %v397, %v533
      %535 = vmatmul.bf16.gmra.mxu0 %v493
      %v536 = vpop.f32.mrf.mxu0
      %v537 = vadd.f32 %v402, %v536
      %v538 = vpop.f32.mrf.mxu0
      %v539 = vadd.f32 %v407, %v538
      %540 = vmatmul.bf16.gmra.mxu0 %v496
      %v541 = vpop.f32.mrf.mxu0
      %v542 = vadd.f32 %v412, %v541
      %v543 = vpop.f32.mrf.mxu0
      %v544 = vadd.f32 %v417, %v543
      %545 = vmatmul.bf16.gmra.mxu0 %v499
      %v546 = vpop.f32.mrf.mxu0
      %v547 = vadd.f32 %v422, %v546
      %v548 = vpop.f32.mrf.mxu0
      %v549 = vadd.f32 %v427, %v548
      %550 = vmatmul.bf16.gmra.mxu0 %v502
      %v551 = vpop.f32.mrf.mxu0
      %v552 = vadd.f32 %v432, %v551
      %v553 = vpop.f32.mrf.mxu0
      %v554 = vadd.f32 %v437, %v553
      %555 = vdwg.mxu0
      %vm556 = vcmask 523264
      %v557 = vsel %vm556, %v517, 0.0
      %558 = vadd.xlane.f32.xlu0 %v557
      %v559 = vpop.xlane.xlu0 %558
      %v560 = vsel %vm556, %v519, 0.0
      %561 = vadd.xlane.f32.xlu0 %v560
      %v562 = vpop.xlane.xlu0 %561
      %v563 = vsel %vm556, %v522, 0.0
      %564 = vadd.xlane.f32.xlu0 %v563
      %v565 = vpop.xlane.xlu0 %564
      %v566 = vsel %vm556, %v524, 0.0
      %567 = vadd.xlane.f32.xlu0 %v566
      %v568 = vpop.xlane.xlu0 %567
      %v569 = vsel %vm556, %v527, 0.0
      %570 = vadd.xlane.f32.xlu0 %v569
      %v571 = vpop.xlane.xlu0 %570
      %v572 = vsel %vm556, %v529, 0.0
      %573 = vadd.xlane.f32.xlu0 %v572
      %v574 = vpop.xlane.xlu0 %573
      %v575 = vsel %vm556, %v532, 0.0
      %576 = vadd.xlane.f32.xlu0 %v575
      %v577 = vpop.xlane.xlu0 %576
      %v578 = vsel %vm556, %v534, 0.0
      %579 = vadd.xlane.f32.xlu0 %v578
      %v580 = vpop.xlane.xlu0 %579
      %v581 = vsel %vm556, %v537, 0.0
      %582 = vadd.xlane.f32.xlu0 %v581
      %v583 = vpop.xlane.xlu0 %582
      %v584 = vsel %vm556, %v539, 0.0
      %585 = vadd.xlane.f32.xlu0 %v584
      %v586 = vpop.xlane.xlu0 %585
      %v587 = vsel %vm556, %v542, 0.0
      %588 = vadd.xlane.f32.xlu0 %v587
      %v589 = vpop.xlane.xlu0 %588
      %v590 = vsel %vm556, %v544, 0.0
      %591 = vadd.xlane.f32.xlu0 %v590
      %v592 = vpop.xlane.xlu0 %591
      %v593 = vsel %vm556, %v547, 0.0
      %594 = vadd.xlane.f32.xlu0 %v593
      %v595 = vpop.xlane.xlu0 %594
      %v596 = vsel %vm556, %v549, 0.0
      %597 = vadd.xlane.f32.xlu0 %v596
      %v598 = vpop.xlane.xlu0 %597
      %v599 = vsel %vm556, %v552, 0.0
      %600 = vadd.xlane.f32.xlu0 %v599
      %v601 = vpop.xlane.xlu0 %600
      %v602 = vsel %vm556, %v554, 0.0
      %603 = vadd.xlane.f32.xlu0 %v602
      %v604 = vpop.xlane.xlu0 %603
      %v605 = vrcp.pop 64.0
      %v606 = vmul.f32 64.0, %v605
      %v607 = vsub.f32 1.0, %v606
      %v608 = vmul.f32 %v605, %v607
      %v609 = vadd.f32 %v605, %v608
      %vm610 = vweird.f32 %v605
      %v611 = vsel %vm610, %v605, %v609
      %v612 = vmul.f32 %v559, %v611
      %v613 = vmul.f32 %v562, %v611
      %v614 = vmul.f32 %v565, %v611
      %v615 = vmul.f32 %v568, %v611
      %v616 = vmul.f32 %v571, %v611
      %v617 = vmul.f32 %v574, %v611
      %v618 = vmul.f32 %v577, %v611
      %v619 = vmul.f32 %v580, %v611
      %v620 = vmul.f32 %v583, %v611
      %v621 = vmul.f32 %v586, %v611
      %v622 = vmul.f32 %v589, %v611
      %v623 = vmul.f32 %v592, %v611
      %v624 = vmul.f32 %v595, %v611
      %v625 = vmul.f32 %v598, %v611
      %v626 = vmul.f32 %v601, %v611
      %v627 = vmul.f32 %v604, %v611
      %v628 = vsub.f32 %v517, %v612
      %v629 = vsub.f32 %v519, %v613
      %v630 = vsub.f32 %v522, %v614
      %v631 = vsub.f32 %v524, %v615
      %v632 = vsub.f32 %v527, %v616
      %v633 = vsub.f32 %v529, %v617
      %v634 = vsub.f32 %v532, %v618
      %v635 = vsub.f32 %v534, %v619
      %v636 = vsub.f32 %v537, %v620
      %v637 = vsub.f32 %v539, %v621
      %v638 = vsub.f32 %v542, %v622
      %v639 = vsub.f32 %v544, %v623
      %v640 = vsub.f32 %v547, %v624
      %v641 = vsub.f32 %v549, %v625
      %v642 = vsub.f32 %v552, %v626
      %v643 = vsub.f32 %v554, %v627
      %v644 = vmul.f32 %v628, %v628
      %v645 = vmul.f32 %v629, %v629
      %v646 = vmul.f32 %v630, %v630
      %v647 = vmul.f32 %v631, %v631
      %v648 = vmul.f32 %v632, %v632
      %v649 = vmul.f32 %v633, %v633
      %v650 = vmul.f32 %v634, %v634
      %v651 = vmul.f32 %v635, %v635
      %v652 = vmul.f32 %v636, %v636
      %v653 = vmul.f32 %v637, %v637
      %v654 = vmul.f32 %v638, %v638
      %v655 = vmul.f32 %v639, %v639
      %v656 = vmul.f32 %v640, %v640
      %v657 = vmul.f32 %v641, %v641
      %v658 = vmul.f32 %v642, %v642
      %v659 = vmul.f32 %v643, %v643
      %v660 = vsel %vm556, %v644, 0.0
      %661 = vadd.xlane.f32.xlu0 %v660
      %v662 = vpop.xlane.xlu0 %661
      %v663 = vsel %vm556, %v645, 0.0
      %664 = vadd.xlane.f32.xlu0 %v663
      %v665 = vpop.xlane.xlu0 %664
      %v666 = vsel %vm556, %v646, 0.0
      %667 = vadd.xlane.f32.xlu0 %v666
      %v668 = vpop.xlane.xlu0 %667
      %v669 = vsel %vm556, %v647, 0.0
      %670 = vadd.xlane.f32.xlu0 %v669
      %v671 = vpop.xlane.xlu0 %670
      %v672 = vsel %vm556, %v648, 0.0
      %673 = vadd.xlane.f32.xlu0 %v672
      %v674 = vpop.xlane.xlu0 %673
      %v675 = vsel %vm556, %v649, 0.0
      %676 = vadd.xlane.f32.xlu0 %v675
      %v677 = vpop.xlane.xlu0 %676
      %v678 = vsel %vm556, %v650, 0.0
      %679 = vadd.xlane.f32.xlu0 %v678
      %v680 = vpop.xlane.xlu0 %679
      %v681 = vsel %vm556, %v651, 0.0
      %682 = vadd.xlane.f32.xlu0 %v681
      %v683 = vpop.xlane.xlu0 %682
      %v684 = vsel %vm556, %v652, 0.0
      %685 = vadd.xlane.f32.xlu0 %v684
      %v686 = vpop.xlane.xlu0 %685
      %v687 = vsel %vm556, %v653, 0.0
      %688 = vadd.xlane.f32.xlu0 %v687
      %v689 = vpop.xlane.xlu0 %688
      %v690 = vsel %vm556, %v654, 0.0
      %691 = vadd.xlane.f32.xlu0 %v690
      %v692 = vpop.xlane.xlu0 %691
      %v693 = vsel %vm556, %v655, 0.0
      %694 = vadd.xlane.f32.xlu0 %v693
      %v695 = vpop.xlane.xlu0 %694
      %v696 = vsel %vm556, %v656, 0.0
      %697 = vadd.xlane.f32.xlu0 %v696
      %v698 = vpop.xlane.xlu0 %697
      %v699 = vsel %vm556, %v657, 0.0
      %700 = vadd.xlane.f32.xlu0 %v699
      %v701 = vpop.xlane.xlu0 %700
      %v702 = vsel %vm556, %v658, 0.0
      %703 = vadd.xlane.f32.xlu0 %v702
      %v704 = vpop.xlane.xlu0 %703
      %v705 = vsel %vm556, %v659, 0.0
      %706 = vadd.xlane.f32.xlu0 %v705
      %v707 = vpop.xlane.xlu0 %706
      %v708 = vmul.f32 %v662, %v611
      %v709 = vmul.f32 %v665, %v611
      %v710 = vmul.f32 %v668, %v611
      %v711 = vmul.f32 %v671, %v611
      %v712 = vmul.f32 %v674, %v611
      %v713 = vmul.f32 %v677, %v611
      %v714 = vmul.f32 %v680, %v611
      %v715 = vmul.f32 %v683, %v611
      %v716 = vmul.f32 %v686, %v611
      %v717 = vmul.f32 %v689, %v611
      %v718 = vmul.f32 %v692, %v611
      %v719 = vmul.f32 %v695, %v611
      %v720 = vmul.f32 %v698, %v611
      %v721 = vmul.f32 %v701, %v611
      %v722 = vmul.f32 %v704, %v611
      %v723 = vmul.f32 %v707, %v611
      %v724 = vadd.f32 %v708, 1e-05
      %v725 = vadd.f32 %v709, 1e-05
      %v726 = vadd.f32 %v710, 1e-05
      %v727 = vadd.f32 %v711, 1e-05
      %v728 = vadd.f32 %v712, 1e-05
      %v729 = vadd.f32 %v713, 1e-05
      %v730 = vadd.f32 %v714, 1e-05
      %v731 = vadd.f32 %v715, 1e-05
      %v732 = vadd.f32 %v716, 1e-05
      %v733 = vadd.f32 %v717, 1e-05
      %v734 = vadd.f32 %v718, 1e-05
      %v735 = vadd.f32 %v719, 1e-05
      %v736 = vadd.f32 %v720, 1e-05
      %v737 = vadd.f32 %v721, 1e-05
      %v738 = vadd.f32 %v722, 1e-05
      %v739 = vadd.f32 %v723, 1e-05
      %v740 = vrsqrt.pop %v724
      %v741 = vmul.f32 %v740, %v724
      %v742 = vmul.f32 %v741, %v740
      %v743 = vmul.f32 0.5, %v742
      %v744 = vsub.f32 1.5, %v743
      %v745 = vmul.f32 %v740, %v744
      %vm746 = vweird.f32 %v724
      %vm747 = vweird.f32 %v740
      %vm748 = vmor %vm746, %vm747
      %v749 = vsel %vm748, %v740, %v745
      %v750 = vrsqrt.pop %v725
      %v751 = vmul.f32 %v750, %v725
      %v752 = vmul.f32 %v751, %v750
      %v753 = vmul.f32 0.5, %v752
      %v754 = vsub.f32 1.5, %v753
      %v755 = vmul.f32 %v750, %v754
      %vm756 = vweird.f32 %v725
      %vm757 = vweird.f32 %v750
      %vm758 = vmor %vm756, %vm757
      %v759 = vsel %vm758, %v750, %v755
      %v760 = vrsqrt.pop %v726
      %v761 = vmul.f32 %v760, %v726
      %v762 = vmul.f32 %v761, %v760
      %v763 = vmul.f32 0.5, %v762
      %v764 = vsub.f32 1.5, %v763
      %v765 = vmul.f32 %v760, %v764
      %vm766 = vweird.f32 %v726
      %vm767 = vweird.f32 %v760
      %vm768 = vmor %vm766, %vm767
      %v769 = vsel %vm768, %v760, %v765
      %v770 = vrsqrt.pop %v727
      %v771 = vmul.f32 %v770, %v727
      %v772 = vmul.f32 %v771, %v770
      %v773 = vmul.f32 0.5, %v772
      %v774 = vsub.f32 1.5, %v773
      %v775 = vmul.f32 %v770, %v774
      %vm776 = vweird.f32 %v727
      %vm777 = vweird.f32 %v770
      %vm778 = vmor %vm776, %vm777
      %v779 = vsel %vm778, %v770, %v775
      %v780 = vrsqrt.pop %v728
      %v781 = vmul.f32 %v780, %v728
      %v782 = vmul.f32 %v781, %v780
      %v783 = vmul.f32 0.5, %v782
      %v784 = vsub.f32 1.5, %v783
      %v785 = vmul.f32 %v780, %v784
      %vm786 = vweird.f32 %v728
      %vm787 = vweird.f32 %v780
      %vm788 = vmor %vm786, %vm787
      %v789 = vsel %vm788, %v780, %v785
      %v790 = vrsqrt.pop %v729
      %v791 = vmul.f32 %v790, %v729
      %v792 = vmul.f32 %v791, %v790
      %v793 = vmul.f32 0.5, %v792
      %v794 = vsub.f32 1.5, %v793
      %v795 = vmul.f32 %v790, %v794
      %vm796 = vweird.f32 %v729
      %vm797 = vweird.f32 %v790
      %vm798 = vmor %vm796, %vm797
      %v799 = vsel %vm798, %v790, %v795
      %v800 = vrsqrt.pop %v730
      %v801 = vmul.f32 %v800, %v730
      %v802 = vmul.f32 %v801, %v800
      %v803 = vmul.f32 0.5, %v802
      %v804 = vsub.f32 1.5, %v803
      %v805 = vmul.f32 %v800, %v804
      %vm806 = vweird.f32 %v730
      %vm807 = vweird.f32 %v800
      %vm808 = vmor %vm806, %vm807
      %v809 = vsel %vm808, %v800, %v805
      %v810 = vrsqrt.pop %v731
      %v811 = vmul.f32 %v810, %v731
      %v812 = vmul.f32 %v811, %v810
      %v813 = vmul.f32 0.5, %v812
      %v814 = vsub.f32 1.5, %v813
      %v815 = vmul.f32 %v810, %v814
      %vm816 = vweird.f32 %v731
      %vm817 = vweird.f32 %v810
      %vm818 = vmor %vm816, %vm817
      %v819 = vsel %vm818, %v810, %v815
      %v820 = vrsqrt.pop %v732
      %v821 = vmul.f32 %v820, %v732
      %v822 = vmul.f32 %v821, %v820
      %v823 = vmul.f32 0.5, %v822
      %v824 = vsub.f32 1.5, %v823
      %v825 = vmul.f32 %v820, %v824
      %vm826 = vweird.f32 %v732
      %vm827 = vweird.f32 %v820
      %vm828 = vmor %vm826, %vm827
      %v829 = vsel %vm828, %v820, %v825
      %v830 = vrsqrt.pop %v733
      %v831 = vmul.f32 %v830, %v733
      %v832 = vmul.f32 %v831, %v830
      %v833 = vmul.f32 0.5, %v832
      %v834 = vsub.f32 1.5, %v833
      %v835 = vmul.f32 %v830, %v834
      %vm836 = vweird.f32 %v733
      %vm837 = vweird.f32 %v830
      %vm838 = vmor %vm836, %vm837
      %v839 = vsel %vm838, %v830, %v835
      %v840 = vrsqrt.pop %v734
      %v841 = vmul.f32 %v840, %v734
      %v842 = vmul.f32 %v841, %v840
      %v843 = vmul.f32 0.5, %v842
      %v844 = vsub.f32 1.5, %v843
      %v845 = vmul.f32 %v840, %v844
      %vm846 = vweird.f32 %v734
      %vm847 = vweird.f32 %v840
      %vm848 = vmor %vm846, %vm847
      %v849 = vsel %vm848, %v840, %v845
      %v850 = vrsqrt.pop %v735
      %v851 = vmul.f32 %v850, %v735
      %v852 = vmul.f32 %v851, %v850
      %v853 = vmul.f32 0.5, %v852
      %v854 = vsub.f32 1.5, %v853
      %v855 = vmul.f32 %v850, %v854
      %vm856 = vweird.f32 %v735
      %vm857 = vweird.f32 %v850
      %vm858 = vmor %vm856, %vm857
      %v859 = vsel %vm858, %v850, %v855
      %v860 = vrsqrt.pop %v736
      %v861 = vmul.f32 %v860, %v736
      %v862 = vmul.f32 %v861, %v860
      %v863 = vmul.f32 0.5, %v862
      %v864 = vsub.f32 1.5, %v863
      %v865 = vmul.f32 %v860, %v864
      %vm866 = vweird.f32 %v736
      %vm867 = vweird.f32 %v860
      %vm868 = vmor %vm866, %vm867
      %v869 = vsel %vm868, %v860, %v865
      %v870 = vrsqrt.pop %v737
      %v871 = vmul.f32 %v870, %v737
      %v872 = vmul.f32 %v871, %v870
      %v873 = vmul.f32 0.5, %v872
      %v874 = vsub.f32 1.5, %v873
      %v875 = vmul.f32 %v870, %v874
      %vm876 = vweird.f32 %v737
      %vm877 = vweird.f32 %v870
      %vm878 = vmor %vm876, %vm877
      %v879 = vsel %vm878, %v870, %v875
      %v880 = vrsqrt.pop %v738
      %v881 = vmul.f32 %v880, %v738
      %v882 = vmul.f32 %v881, %v880
      %v883 = vmul.f32 0.5, %v882
      %v884 = vsub.f32 1.5, %v883
      %v885 = vmul.f32 %v880, %v884
      %vm886 = vweird.f32 %v738
      %vm887 = vweird.f32 %v880
      %vm888 = vmor %vm886, %vm887
      %v889 = vsel %vm888, %v880, %v885
      %v890 = vrsqrt.pop %v739
      %v891 = vmul.f32 %v890, %v739
      %v892 = vmul.f32 %v891, %v890
      %v893 = vmul.f32 0.5, %v892
      %v894 = vsub.f32 1.5, %v893
      %v895 = vmul.f32 %v890, %v894
      %vm896 = vweird.f32 %v739
      %vm897 = vweird.f32 %v890
      %vm898 = vmor %vm896, %vm897
      %v899 = vsel %vm898, %v890, %v895
      %v900 = vmul.f32 %v628, %v749
      %v901 = vmul.f32 %v629, %v759
      %v902 = vmul.f32 %v630, %v769
      %v903 = vmul.f32 %v631, %v779
      %v904 = vmul.f32 %v632, %v789
      %v905 = vmul.f32 %v633, %v799
      %v906 = vmul.f32 %v634, %v809
      %v907 = vmul.f32 %v635, %v819
      %v908 = vmul.f32 %v636, %v829
      %v909 = vmul.f32 %v637, %v839
      %v910 = vmul.f32 %v638, %v849
      %v911 = vmul.f32 %v639, %v859
      %v912 = vmul.f32 %v640, %v869
      %v913 = vmul.f32 %v641, %v879
      %v914 = vmul.f32 %v642, %v889
      %v915 = vmul.f32 %v643, %v899
      %vm916 = vcmp.ge.f32.partialorder %v900, 0.0
      %vm917 = vcmp.ge.f32.partialorder %v901, 0.0
      %vm918 = vcmp.ge.f32.partialorder %v902, 0.0
      %vm919 = vcmp.ge.f32.partialorder %v903, 0.0
      %vm920 = vcmp.ge.f32.partialorder %v904, 0.0
      %vm921 = vcmp.ge.f32.partialorder %v905, 0.0
      %vm922 = vcmp.ge.f32.partialorder %v906, 0.0
      %vm923 = vcmp.ge.f32.partialorder %v907, 0.0
      %vm924 = vcmp.ge.f32.partialorder %v908, 0.0
      %vm925 = vcmp.ge.f32.partialorder %v909, 0.0
      %vm926 = vcmp.ge.f32.partialorder %v910, 0.0
      %vm927 = vcmp.ge.f32.partialorder %v911, 0.0
      %vm928 = vcmp.ge.f32.partialorder %v912, 0.0
      %vm929 = vcmp.ge.f32.partialorder %v913, 0.0
      %vm930 = vcmp.ge.f32.partialorder %v914, 0.0
      %vm931 = vcmp.ge.f32.partialorder %v915, 0.0
      %v932 = vmul.f32 %v900, 0.01
      %v933 = vmul.f32 %v901, 0.01
      %v934 = vmul.f32 %v902, 0.01
      %v935 = vmul.f32 %v903, 0.01
      %v936 = vmul.f32 %v904, 0.01
      %v937 = vmul.f32 %v905, 0.01
      %v938 = vmul.f32 %v906, 0.01
      %v939 = vmul.f32 %v907, 0.01
      %v940 = vmul.f32 %v908, 0.01
      %v941 = vmul.f32 %v909, 0.01
      %v942 = vmul.f32 %v910, 0.01
      %v943 = vmul.f32 %v911, 0.01
      %v944 = vmul.f32 %v912, 0.01
      %v945 = vmul.f32 %v913, 0.01
      %v946 = vmul.f32 %v914, 0.01
      %v947 = vmul.f32 %v915, 0.01
      %v948 = vsel %vm916, %v900, %v932
      %v949 = vsel %vm917, %v901, %v933
      %v950 = vsel %vm918, %v902, %v934
      %v951 = vsel %vm919, %v903, %v935
      %v952 = vsel %vm920, %v904, %v936
      %v953 = vsel %vm921, %v905, %v937
      %v954 = vsel %vm922, %v906, %v938
      %v955 = vsel %vm923, %v907, %v939
      %v956 = vsel %vm924, %v908, %v940
      %v957 = vsel %vm925, %v909, %v941
      %v958 = vsel %vm926, %v910, %v942
      %v959 = vsel %vm927, %v911, %v943
      %v960 = vsel %vm928, %v912, %v944
      %v961 = vsel %vm929, %v913, %v945
      %v962 = vsel %vm930, %v914, %v946
      %v963 = vsel %vm931, %v915, %v947
      %vm964 = vcmask 1044408
      %965 = vst.msk [vmem:[#allocation2] sm:$0xf] %vm964, 0
      %966 = vst.msk [vmem:[#allocation2 + $0x8] sm:$0xf] %vm964, 0
      %967 = vst.msk [vmem:[#allocation2 + $0x10] sm:$0xf] %vm964, 0
      %968 = vst.msk [vmem:[#allocation2 + $0x18] sm:$0xf] %vm964, 0
      %969 = vst.msk [vmem:[#allocation2 + $0x20] sm:$0xf] %vm964, 0
      %970 = vst.msk [vmem:[#allocation2 + $0x28] sm:$0xf] %vm964, 0
      %971 = vst.msk [vmem:[#allocation2 + $0x30] sm:$0xf] %vm964, 0
      %972 = vst.msk [vmem:[#allocation2 + $0x38] sm:$0xf] %vm964, 0
      %973 = vst.msk [vmem:[#allocation2 + $0x40] sm:$0xf] %vm964, 0
      %974 = vst.msk [vmem:[#allocation2 + $0x48] sm:$0xf] %vm964, 0
      %975 = vst.msk [vmem:[#allocation2 + $0x50] sm:$0xf] %vm964, 0
      %976 = vst.msk [vmem:[#allocation2 + $0x58] sm:$0xf] %vm964, 0
      %977 = vst.msk [vmem:[#allocation2 + $0x60] sm:$0xf] %vm964, 0
      %978 = vst.msk [vmem:[#allocation2 + $0x68] sm:$0xf] %vm964, 0
      %979 = vst.msk [vmem:[#allocation2 + $0x70] sm:$0xf] %vm964, 0
      %980 = vst.msk [vmem:[#allocation2 + $0x78] sm:$0xf] %vm964, 0
      %vm981 = vcmask 593408
      %982 = vst.msk [vmem:[#allocation2 + $0x4] sm:$0xf] %vm981, 0
      %983 = vst.msk [vmem:[#allocation2 + $0xc] sm:$0xf] %vm981, 0
      %984 = vst.msk [vmem:[#allocation2 + $0x14] sm:$0xf] %vm981, 0
      %985 = vst.msk [vmem:[#allocation2 + $0x1c] sm:$0xf] %vm981, 0
      %986 = vst.msk [vmem:[#allocation2 + $0x24] sm:$0xf] %vm981, 0
      %987 = vst.msk [vmem:[#allocation2 + $0x2c] sm:$0xf] %vm981, 0
      %988 = vst.msk [vmem:[#allocation2 + $0x34] sm:$0xf] %vm981, 0
      %989 = vst.msk [vmem:[#allocation2 + $0x3c] sm:$0xf] %vm981, 0
      %990 = vst.msk [vmem:[#allocation2 + $0x44] sm:$0xf] %vm981, 0
      %991 = vst.msk [vmem:[#allocation2 + $0x4c] sm:$0xf] %vm981, 0
      %992 = vst.msk [vmem:[#allocation2 + $0x54] sm:$0xf] %vm981, 0
      %993 = vst.msk [vmem:[#allocation2 + $0x5c] sm:$0xf] %vm981, 0
      %994 = vst.msk [vmem:[#allocation2 + $0x64] sm:$0xf] %vm981, 0
      %995 = vst.msk [vmem:[#allocation2 + $0x6c] sm:$0xf] %vm981, 0
      %996 = vst.msk [vmem:[#allocation2 + $0x74] sm:$0xf] %vm981, 0
      %997 = vst.msk [vmem:[#allocation2 + $0x7c] sm:$0xf] %vm981, 0
      %v998 = vpack.c.bf16 %v948, %v948
      %v999 = vpack.c.bf16 %v949, %v949
      %v1000 = vpack.c.bf16 %v950, %v950
      %v1001 = vpack.c.bf16 %v951, %v951
      %v1002 = vpack.c.bf16 %v952, %v952
      %v1003 = vpack.c.bf16 %v953, %v953
      %v1004 = vpack.c.bf16 %v954, %v954
      %v1005 = vpack.c.bf16 %v955, %v955
      %v1006 = vpack.c.bf16 %v956, %v956
      %v1007 = vpack.c.bf16 %v957, %v957
      %v1008 = vpack.c.bf16 %v958, %v958
      %v1009 = vpack.c.bf16 %v959, %v959
      %v1010 = vpack.c.bf16 %v960, %v960
      %v1011 = vpack.c.bf16 %v961, %v961
      %v1012 = vpack.c.bf16 %v962, %v962
      %v1013 = vpack.c.bf16 %v963, %v963
      %vm1014 = vcmask 519168
      %1015 = vst.msk [vmem:[#allocation2 + $0x4] sm:$0xf] %vm1014, %v998
      %1016 = vst.msk [vmem:[#allocation2 + $0xc] sm:$0xf] %vm1014, %v999
      %1017 = vst.msk [vmem:[#allocation2 + $0x14] sm:$0xf] %vm1014, %v1000
      %1018 = vst.msk [vmem:[#allocation2 + $0x1c] sm:$0xf] %vm1014, %v1001
      %1019 = vst.msk [vmem:[#allocation2 + $0x24] sm:$0xf] %vm1014, %v1002
      %1020 = vst.msk [vmem:[#allocation2 + $0x2c] sm:$0xf] %vm1014, %v1003
      %1021 = vst.msk [vmem:[#allocation2 + $0x34] sm:$0xf] %vm1014, %v1004
      %1022 = vst.msk [vmem:[#allocation2 + $0x3c] sm:$0xf] %vm1014, %v1005
      %1023 = vst.msk [vmem:[#allocation2 + $0x44] sm:$0xf] %vm1014, %v1006
      %1024 = vst.msk [vmem:[#allocation2 + $0x4c] sm:$0xf] %vm1014, %v1007
      %1025 = vst.msk [vmem:[#allocation2 + $0x54] sm:$0xf] %vm1014, %v1008
      %1026 = vst.msk [vmem:[#allocation2 + $0x5c] sm:$0xf] %vm1014, %v1009
      %1027 = vst.msk [vmem:[#allocation2 + $0x64] sm:$0xf] %vm1014, %v1010
      %1028 = vst.msk [vmem:[#allocation2 + $0x6c] sm:$0xf] %vm1014, %v1011
      %1029 = vst.msk [vmem:[#allocation2 + $0x74] sm:$0xf] %vm1014, %v1012
      %1030 = vst.msk [vmem:[#allocation2 + $0x7c] sm:$0xf] %vm1014, %v1013
      %v1031 = vld [vmem:[%s3] sm:$0xf]
      %v1032 = vld [vmem:[%s3 + $0x4] sm:$0xf]
      %v1033 = vld [vmem:[%s3 + $0x8] sm:$0xf]
      %v1034 = vld [vmem:[%s3 + $0xc] sm:$0xf]
      %v1035 = vld [vmem:[%s3 + $0x10] sm:$0xf]
      %v1036 = vld [vmem:[%s3 + $0x14] sm:$0xf]
      %v1037 = vld [vmem:[%s3 + $0x18] sm:$0xf]
      %v1038 = vld [vmem:[%s3 + $0x1c] sm:$0xf]
      %v1039 = vld [vmem:[%s3 + $0x20] sm:$0xf]
      %v1040 = vld [vmem:[%s3 + $0x24] sm:$0xf]
      %v1041 = vld [vmem:[%s3 + $0x28] sm:$0xf]
      %v1042 = vld [vmem:[%s3 + $0x2c] sm:$0xf]
      %v1043 = vld [vmem:[%s3 + $0x30] sm:$0xf]
      %v1044 = vld [vmem:[%s3 + $0x34] sm:$0xf]
      %v1045 = vld [vmem:[%s3 + $0x38] sm:$0xf]
      %v1046 = vld [vmem:[%s3 + $0x3c] sm:$0xf]
      %s1047 = scalar_lea.vmem %s3, 64
      %v1048 = vld [vmem:[%s1047] sm:$0xf]
      %v1049 = vld [vmem:[%s1047 + $0x4] sm:$0xf]
      %v1050 = vld [vmem:[%s1047 + $0x8] sm:$0xf]
      %v1051 = vld [vmem:[%s1047 + $0xc] sm:$0xf]
      %v1052 = vld [vmem:[%s1047 + $0x10] sm:$0xf]
      %v1053 = vld [vmem:[%s1047 + $0x14] sm:$0xf]
      %v1054 = vld [vmem:[%s1047 + $0x18] sm:$0xf]
      %v1055 = vld [vmem:[%s1047 + $0x1c] sm:$0xf]
      %v1056 = vld [vmem:[%s1047 + $0x20] sm:$0xf]
      %v1057 = vld [vmem:[%s1047 + $0x24] sm:$0xf]
      %v1058 = vld [vmem:[%s1047 + $0x28] sm:$0xf]
      %v1059 = vld [vmem:[%s1047 + $0x2c] sm:$0xf]
      %v1060 = vld [vmem:[%s1047 + $0x30] sm:$0xf]
      %v1061 = vld [vmem:[%s1047 + $0x34] sm:$0xf]
      %v1062 = vld [vmem:[%s1047 + $0x38] sm:$0xf]
      %v1063 = vld [vmem:[%s1047 + $0x3c] sm:$0xf]
      %v1080 = vunpack.c.l.b16 %v1031
      %v1081 = vunpack.c.l.b16 %v1032
      %v1082 = vunpack.c.l.b16 %v1033
      %v1083 = vunpack.c.l.b16 %v1034
      %v1084 = vunpack.c.l.b16 %v1035
      %v1085 = vunpack.c.l.b16 %v1036
      %v1086 = vunpack.c.l.b16 %v1037
      %v1087 = vunpack.c.l.b16 %v1038
      %v1088 = vunpack.c.l.b16 %v1039
      %v1089 = vunpack.c.l.b16 %v1040
      %v1090 = vunpack.c.l.b16 %v1041
      %v1091 = vunpack.c.l.b16 %v1042
      %v1092 = vunpack.c.l.b16 %v1043
      %v1093 = vunpack.c.l.b16 %v1044
      %v1094 = vunpack.c.l.b16 %v1045
      %v1095 = vunpack.c.l.b16 %v1046
      %v1096 = vpack.c.b16 %v1081, %v1080
      %v1097 = vpack.c.b16 %v1083, %v1082
      %v1098 = vpack.c.b16 %v1085, %v1084
      %v1099 = vpack.c.b16 %v1087, %v1086
      %v1100 = vpack.c.b16 %v1089, %v1088
      %v1101 = vpack.c.b16 %v1091, %v1090
      %v1102 = vpack.c.b16 %v1093, %v1092
      %v1103 = vpack.c.b16 %v1095, %v1094
      %v1128 = vunpack.c.l.b16 %v1048
      %v1129 = vunpack.c.l.b16 %v1049
      %v1130 = vunpack.c.l.b16 %v1050
      %v1131 = vunpack.c.l.b16 %v1051
      %v1132 = vunpack.c.l.b16 %v1052
      %v1133 = vunpack.c.l.b16 %v1053
      %v1134 = vunpack.c.l.b16 %v1054
      %v1135 = vunpack.c.l.b16 %v1055
      %v1136 = vunpack.c.l.b16 %v1056
      %v1137 = vunpack.c.l.b16 %v1057
      %v1138 = vunpack.c.l.b16 %v1058
      %v1139 = vunpack.c.l.b16 %v1059
      %v1140 = vunpack.c.l.b16 %v1060
      %v1141 = vunpack.c.l.b16 %v1061
      %v1142 = vunpack.c.l.b16 %v1062
      %v1143 = vunpack.c.l.b16 %v1063
      %v1144 = vpack.c.b16 %v1129, %v1128
      %v1145 = vpack.c.b16 %v1131, %v1130
      %v1146 = vpack.c.b16 %v1133, %v1132
      %v1147 = vpack.c.b16 %v1135, %v1134
      %v1148 = vpack.c.b16 %v1137, %v1136
      %v1149 = vpack.c.b16 %v1139, %v1138
      %v1150 = vpack.c.b16 %v1141, %v1140
      %v1151 = vpack.c.b16 %v1143, %v1142
      %v1160 = vld [vmem:[#allocation2] sm:$0xff]
      %v1161 = vld [vmem:[#allocation2 + $0x8] sm:$0xff]
      %v1162 = vld [vmem:[#allocation2 + $0x10] sm:$0xff]
      %v1163 = vld [vmem:[#allocation2 + $0x18] sm:$0xff]
      %v1164 = vld [vmem:[#allocation2 + $0x20] sm:$0xff]
      %v1165 = vld [vmem:[#allocation2 + $0x28] sm:$0xff]
      %v1166 = vld [vmem:[#allocation2 + $0x30] sm:$0xff]
      %v1167 = vld [vmem:[#allocation2 + $0x38] sm:$0xff]
      %v1168 = vld [vmem:[#allocation2 + $0x40] sm:$0xff]
      %v1169 = vld [vmem:[#allocation2 + $0x48] sm:$0xff]
      %v1170 = vld [vmem:[#allocation2 + $0x50] sm:$0xff]
      %v1171 = vld [vmem:[#allocation2 + $0x58] sm:$0xff]
      %v1172 = vld [vmem:[#allocation2 + $0x60] sm:$0xff]
      %v1173 = vld [vmem:[#allocation2 + $0x68] sm:$0xff]
      %v1174 = vld [vmem:[#allocation2 + $0x70] sm:$0xff]
      %v1175 = vld [vmem:[#allocation2 + $0x78] sm:$0xff]
      %v1176 = vunpack.c.l.bf16 %v1160
      %v1177 = vunpack.c.h.bf16 %v1160
      %v1178 = vunpack.c.l.bf16 %v1161
      %v1179 = vunpack.c.h.bf16 %v1161
      %v1180 = vunpack.c.l.bf16 %v1162
      %v1181 = vunpack.c.h.bf16 %v1162
      %v1182 = vunpack.c.l.bf16 %v1163
      %v1183 = vunpack.c.h.bf16 %v1163
      %v1184 = vunpack.c.l.bf16 %v1164
      %v1185 = vunpack.c.h.bf16 %v1164
      %v1186 = vunpack.c.l.bf16 %v1165
      %v1187 = vunpack.c.h.bf16 %v1165
      %v1188 = vunpack.c.l.bf16 %v1166
      %v1189 = vunpack.c.h.bf16 %v1166
      %v1190 = vunpack.c.l.bf16 %v1167
      %v1191 = vunpack.c.h.bf16 %v1167
      %v1192 = vunpack.c.l.bf16 %v1168
      %v1193 = vunpack.c.h.bf16 %v1168
      %v1194 = vunpack.c.l.bf16 %v1169
      %v1195 = vunpack.c.h.bf16 %v1169
      %v1196 = vunpack.c.l.bf16 %v1170
      %v1197 = vunpack.c.h.bf16 %v1170
      %v1198 = vunpack.c.l.bf16 %v1171
      %v1199 = vunpack.c.h.bf16 %v1171
      %v1200 = vunpack.c.l.bf16 %v1172
      %v1201 = vunpack.c.h.bf16 %v1172
      %v1202 = vunpack.c.l.bf16 %v1173
      %v1203 = vunpack.c.h.bf16 %v1173
      %v1204 = vunpack.c.l.bf16 %v1174
      %v1205 = vunpack.c.h.bf16 %v1174
      %v1206 = vunpack.c.l.bf16 %v1175
      %v1207 = vunpack.c.h.bf16 %v1175
      %1208 = vrot.lane.b32.xlu0 %v245, 119
      %v1209 = vpop.permute.xlu0 %1208
      %v1211 = vmul.f32 %v1176, %v1209
      %v1212 = vmul.f32 %v1177, %v1209
      %v1213 = vmul.f32 %v1178, %v1209
      %v1214 = vmul.f32 %v1179, %v1209
      %v1215 = vmul.f32 %v1180, %v1209
      %v1216 = vmul.f32 %v1181, %v1209
      %v1217 = vmul.f32 %v1182, %v1209
      %v1218 = vmul.f32 %v1183, %v1209
      %v1219 = vmul.f32 %v1184, %v1209
      %v1220 = vmul.f32 %v1185, %v1209
      %v1221 = vmul.f32 %v1186, %v1209
      %v1222 = vmul.f32 %v1187, %v1209
      %v1223 = vmul.f32 %v1188, %v1209
      %v1224 = vmul.f32 %v1189, %v1209
      %v1225 = vmul.f32 %v1190, %v1209
      %v1226 = vmul.f32 %v1191, %v1209
      %v1227 = vmul.f32 %v1192, %v1209
      %v1228 = vmul.f32 %v1193, %v1209
      %v1229 = vmul.f32 %v1194, %v1209
      %v1230 = vmul.f32 %v1195, %v1209
      %v1231 = vmul.f32 %v1196, %v1209
      %v1232 = vmul.f32 %v1197, %v1209
      %v1233 = vmul.f32 %v1198, %v1209
      %v1234 = vmul.f32 %v1199, %v1209
      %v1235 = vmul.f32 %v1200, %v1209
      %v1236 = vmul.f32 %v1201, %v1209
      %v1237 = vmul.f32 %v1202, %v1209
      %v1238 = vmul.f32 %v1203, %v1209
      %v1239 = vmul.f32 %v1204, %v1209
      %v1240 = vmul.f32 %v1205, %v1209
      %v1241 = vmul.f32 %v1206, %v1209
      %v1242 = vmul.f32 %v1207, %v1209
      %v1243 = vpack.c.bf16 %v1212, %v1211
      %v1244 = vpack.c.bf16 %v1214, %v1213
      %v1245 = vpack.c.bf16 %v1216, %v1215
      %v1246 = vpack.c.bf16 %v1218, %v1217
      %v1247 = vpack.c.bf16 %v1220, %v1219
      %v1248 = vpack.c.bf16 %v1222, %v1221
      %v1249 = vpack.c.bf16 %v1224, %v1223
      %v1250 = vpack.c.bf16 %v1226, %v1225
      %v1251 = vpack.c.bf16 %v1228, %v1227
      %v1252 = vpack.c.bf16 %v1230, %v1229
      %v1253 = vpack.c.bf16 %v1232, %v1231
      %v1254 = vpack.c.bf16 %v1234, %v1233
      %v1255 = vpack.c.bf16 %v1236, %v1235
      %v1256 = vpack.c.bf16 %v1238, %v1237
      %v1257 = vpack.c.bf16 %v1240, %v1239
      %v1258 = vpack.c.bf16 %v1242, %v1241
      %v1275 = vunpack.c.l.b16 %v1243
      %v1276 = vunpack.c.h.b16 %v1243
      %v1277 = vunpack.c.l.b16 %v1244
      %v1278 = vunpack.c.h.b16 %v1244
      %v1279 = vunpack.c.l.b16 %v1245
      %v1280 = vunpack.c.h.b16 %v1245
      %v1281 = vunpack.c.l.b16 %v1246
      %v1282 = vunpack.c.h.b16 %v1246
      %v1283 = vunpack.c.l.b16 %v1247
      %v1284 = vunpack.c.h.b16 %v1247
      %v1285 = vunpack.c.l.b16 %v1248
      %v1286 = vunpack.c.h.b16 %v1248
      %v1287 = vunpack.c.l.b16 %v1249
      %v1288 = vunpack.c.h.b16 %v1249
      %v1289 = vunpack.c.l.b16 %v1250
      %v1290 = vunpack.c.h.b16 %v1250
      %v1291 = vunpack.c.l.b16 %v1251
      %v1292 = vunpack.c.h.b16 %v1251
      %v1293 = vunpack.c.l.b16 %v1252
      %v1294 = vunpack.c.h.b16 %v1252
      %v1295 = vunpack.c.l.b16 %v1253
      %v1296 = vunpack.c.h.b16 %v1253
      %v1297 = vunpack.c.l.b16 %v1254
      %v1298 = vunpack.c.h.b16 %v1254
      %v1299 = vunpack.c.l.b16 %v1255
      %v1300 = vunpack.c.h.b16 %v1255
      %v1301 = vunpack.c.l.b16 %v1256
      %v1302 = vunpack.c.h.b16 %v1256
      %v1303 = vunpack.c.l.b16 %v1257
      %v1304 = vunpack.c.h.b16 %v1257
      %v1305 = vunpack.c.l.b16 %v1258
      %v1306 = vunpack.c.h.b16 %v1258
      %v1307 = vpack.c.b16 %v1277, %v1275
      %v1308 = vpack.c.b16 %v1278, %v1276
      %v1309 = vpack.c.b16 %v1281, %v1279
      %v1310 = vpack.c.b16 %v1282, %v1280
      %v1311 = vpack.c.b16 %v1285, %v1283
      %v1312 = vpack.c.b16 %v1286, %v1284
      %v1313 = vpack.c.b16 %v1289, %v1287
      %v1314 = vpack.c.b16 %v1290, %v1288
      %v1315 = vpack.c.b16 %v1293, %v1291
      %v1316 = vpack.c.b16 %v1294, %v1292
      %v1317 = vpack.c.b16 %v1297, %v1295
      %v1318 = vpack.c.b16 %v1298, %v1296
      %v1319 = vpack.c.b16 %v1301, %v1299
      %v1320 = vpack.c.b16 %v1302, %v1300
      %v1321 = vpack.c.b16 %v1305, %v1303
      %v1322 = vpack.c.b16 %v1306, %v1304
      %v1339 = vunpack.c.l.b16 %v1160
      %v1340 = vunpack.c.h.b16 %v1160
      %v1341 = vunpack.c.l.b16 %v1161
      %v1342 = vunpack.c.h.b16 %v1161
      %v1343 = vunpack.c.l.b16 %v1162
      %v1344 = vunpack.c.h.b16 %v1162
      %v1345 = vunpack.c.l.b16 %v1163
      %v1346 = vunpack.c.h.b16 %v1163
      %v1347 = vunpack.c.l.b16 %v1164
      %v1348 = vunpack.c.h.b16 %v1164
      %v1349 = vunpack.c.l.b16 %v1165
      %v1350 = vunpack.c.h.b16 %v1165
      %v1351 = vunpack.c.l.b16 %v1166
      %v1352 = vunpack.c.h.b16 %v1166
      %v1353 = vunpack.c.l.b16 %v1167
      %v1354 = vunpack.c.h.b16 %v1167
      %v1355 = vunpack.c.l.b16 %v1168
      %v1356 = vunpack.c.h.b16 %v1168
      %v1357 = vunpack.c.l.b16 %v1169
      %v1358 = vunpack.c.h.b16 %v1169
      %v1359 = vunpack.c.l.b16 %v1170
      %v1360 = vunpack.c.h.b16 %v1170
      %v1361 = vunpack.c.l.b16 %v1171
      %v1362 = vunpack.c.h.b16 %v1171
      %v1363 = vunpack.c.l.b16 %v1172
      %v1364 = vunpack.c.h.b16 %v1172
      %v1365 = vunpack.c.l.b16 %v1173
      %v1366 = vunpack.c.h.b16 %v1173
      %v1367 = vunpack.c.l.b16 %v1174
      %v1368 = vunpack.c.h.b16 %v1174
      %v1369 = vunpack.c.l.b16 %v1175
      %v1370 = vunpack.c.h.b16 %v1175
      %v1371 = vpack.c.b16 %v1341, %v1339
      %v1372 = vpack.c.b16 %v1342, %v1340
      %v1373 = vpack.c.b16 %v1345, %v1343
      %v1374 = vpack.c.b16 %v1346, %v1344
      %v1375 = vpack.c.b16 %v1349, %v1347
      %v1376 = vpack.c.b16 %v1350, %v1348
      %v1377 = vpack.c.b16 %v1353, %v1351
      %v1378 = vpack.c.b16 %v1354, %v1352
      %v1379 = vpack.c.b16 %v1357, %v1355
      %v1380 = vpack.c.b16 %v1358, %v1356
      %v1381 = vpack.c.b16 %v1361, %v1359
      %v1382 = vpack.c.b16 %v1362, %v1360
      %v1383 = vpack.c.b16 %v1365, %v1363
      %v1384 = vpack.c.b16 %v1366, %v1364
      %v1385 = vpack.c.b16 %v1369, %v1367
      %v1386 = vpack.c.b16 %v1370, %v1368
      %1387 = vrot.lane.b32.xlu0 %v1371, 127
      %v1388 = vpop.permute.xlu0 %1387
      %1389 = vrot.lane.b32.xlu0 %v1372, 127
      %v1390 = vpop.permute.xlu0 %1389
      %1391 = vrot.lane.b32.xlu0 %v1373, 127
      %v1392 = vpop.permute.xlu0 %1391
      %1393 = vrot.lane.b32.xlu0 %v1374, 127
      %v1394 = vpop.permute.xlu0 %1393
      %1395 = vrot.lane.b32.xlu0 %v1375, 127
      %v1396 = vpop.permute.xlu0 %1395
      %1397 = vrot.lane.b32.xlu0 %v1376, 127
      %v1398 = vpop.permute.xlu0 %1397
      %1399 = vrot.lane.b32.xlu0 %v1377, 127
      %v1400 = vpop.permute.xlu0 %1399
      %1401 = vrot.lane.b32.xlu0 %v1378, 127
      %v1402 = vpop.permute.xlu0 %1401
      %1403 = vrot.lane.b32.xlu0 %v1379, 127
      %v1404 = vpop.permute.xlu0 %1403
      %1405 = vrot.lane.b32.xlu0 %v1380, 127
      %v1406 = vpop.permute.xlu0 %1405
      %1407 = vrot.lane.b32.xlu0 %v1381, 127
      %v1408 = vpop.permute.xlu0 %1407
      %1409 = vrot.lane.b32.xlu0 %v1382, 127
      %v1410 = vpop.permute.xlu0 %1409
      %1411 = vrot.lane.b32.xlu0 %v1383, 127
      %v1412 = vpop.permute.xlu0 %1411
      %1413 = vrot.lane.b32.xlu0 %v1384, 127
      %v1414 = vpop.permute.xlu0 %1413
      %1415 = vrot.lane.b32.xlu0 %v1385, 127
      %v1416 = vpop.permute.xlu0 %1415
      %1417 = vrot.lane.b32.xlu0 %v1386, 127
      %v1418 = vpop.permute.xlu0 %1417
      %vm1419 = vcmask 1039360
      %v1420 = vsel %vm1419, %v1388, %v1390
      %v1421 = vsel %vm1419, %v1392, %v1394
      %v1422 = vsel %vm1419, %v1396, %v1398
      %v1423 = vsel %vm1419, %v1400, %v1402
      %v1424 = vsel %vm1419, %v1404, %v1406
      %v1425 = vsel %vm1419, %v1408, %v1410
      %v1426 = vsel %vm1419, %v1412, %v1414
      %v1427 = vsel %vm1419, %v1416, %v1418
      %s1428 = scalar_lea.vmem %s3, 128
      %v1429 = vld [vmem:[%s1428] sm:$0xf]
      %v1430 = vld [vmem:[%s1428 + $0x4] sm:$0xf]
      %v1431 = vld [vmem:[%s1428 + $0x8] sm:$0xf]
      %v1432 = vld [vmem:[%s1428 + $0xc] sm:$0xf]
      %v1433 = vld [vmem:[%s1428 + $0x10] sm:$0xf]
      %v1434 = vld [vmem:[%s1428 + $0x14] sm:$0xf]
      %v1435 = vld [vmem:[%s1428 + $0x18] sm:$0xf]
      %v1436 = vld [vmem:[%s1428 + $0x1c] sm:$0xf]
      %v1437 = vld [vmem:[%s1428 + $0x20] sm:$0xf]
      %v1438 = vld [vmem:[%s1428 + $0x24] sm:$0xf]
      %v1439 = vld [vmem:[%s1428 + $0x28] sm:$0xf]
      %v1440 = vld [vmem:[%s1428 + $0x2c] sm:$0xf]
      %v1441 = vld [vmem:[%s1428 + $0x30] sm:$0xf]
      %v1442 = vld [vmem:[%s1428 + $0x34] sm:$0xf]
      %v1443 = vld [vmem:[%s1428 + $0x38] sm:$0xf]
      %v1444 = vld [vmem:[%s1428 + $0x3c] sm:$0xf]
      %s1445 = scalar_lea.vmem %s3, 192
      %v1446 = vld [vmem:[%s1445] sm:$0xf]
      %v1447 = vld [vmem:[%s1445 + $0x4] sm:$0xf]
      %v1448 = vld [vmem:[%s1445 + $0x8] sm:$0xf]
      %v1449 = vld [vmem:[%s1445 + $0xc] sm:$0xf]
      %v1450 = vld [vmem:[%s1445 + $0x10] sm:$0xf]
      %v1451 = vld [vmem:[%s1445 + $0x14] sm:$0xf]
      %v1452 = vld [vmem:[%s1445 + $0x18] sm:$0xf]
      %v1453 = vld [vmem:[%s1445 + $0x1c] sm:$0xf]
      %v1454 = vld [vmem:[%s1445 + $0x20] sm:$0xf]
      %v1455 = vld [vmem:[%s1445 + $0x24] sm:$0xf]
      %v1456 = vld [vmem:[%s1445 + $0x28] sm:$0xf]
      %v1457 = vld [vmem:[%s1445 + $0x2c] sm:$0xf]
      %v1458 = vld [vmem:[%s1445 + $0x30] sm:$0xf]
      %v1459 = vld [vmem:[%s1445 + $0x34] sm:$0xf]
      %v1460 = vld [vmem:[%s1445 + $0x38] sm:$0xf]
      %v1461 = vld [vmem:[%s1445 + $0x3c] sm:$0xf]
      %v1478 = vunpack.c.l.b16 %v1429
      %v1479 = vunpack.c.l.b16 %v1430
      %v1480 = vunpack.c.l.b16 %v1431
      %v1481 = vunpack.c.l.b16 %v1432
      %v1482 = vunpack.c.l.b16 %v1433
      %v1483 = vunpack.c.l.b16 %v1434
      %v1484 = vunpack.c.l.b16 %v1435
      %v1485 = vunpack.c.l.b16 %v1436
      %v1486 = vunpack.c.l.b16 %v1437
      %v1487 = vunpack.c.l.b16 %v1438
      %v1488 = vunpack.c.l.b16 %v1439
      %v1489 = vunpack.c.l.b16 %v1440
      %v1490 = vunpack.c.l.b16 %v1441
      %v1491 = vunpack.c.l.b16 %v1442
      %v1492 = vunpack.c.l.b16 %v1443
      %v1493 = vunpack.c.l.b16 %v1444
      %v1494 = vpack.c.b16 %v1479, %v1478
      %v1495 = vpack.c.b16 %v1481, %v1480
      %v1496 = vpack.c.b16 %v1483, %v1482
      %v1497 = vpack.c.b16 %v1485, %v1484
      %v1498 = vpack.c.b16 %v1487, %v1486
      %v1499 = vpack.c.b16 %v1489, %v1488
      %v1500 = vpack.c.b16 %v1491, %v1490
      %v1501 = vpack.c.b16 %v1493, %v1492
      %v1526 = vunpack.c.l.b16 %v1446
      %v1527 = vunpack.c.l.b16 %v1447
      %v1528 = vunpack.c.l.b16 %v1448
      %v1529 = vunpack.c.l.b16 %v1449
      %v1530 = vunpack.c.l.b16 %v1450
      %v1531 = vunpack.c.l.b16 %v1451
      %v1532 = vunpack.c.l.b16 %v1452
      %v1533 = vunpack.c.l.b16 %v1453
      %v1534 = vunpack.c.l.b16 %v1454
      %v1535 = vunpack.c.l.b16 %v1455
      %v1536 = vunpack.c.l.b16 %v1456
      %v1537 = vunpack.c.l.b16 %v1457
      %v1538 = vunpack.c.l.b16 %v1458
      %v1539 = vunpack.c.l.b16 %v1459
      %v1540 = vunpack.c.l.b16 %v1460
      %v1541 = vunpack.c.l.b16 %v1461
      %v1542 = vpack.c.b16 %v1527, %v1526
      %v1543 = vpack.c.b16 %v1529, %v1528
      %v1544 = vpack.c.b16 %v1531, %v1530
      %v1545 = vpack.c.b16 %v1533, %v1532
      %v1546 = vpack.c.b16 %v1535, %v1534
      %v1547 = vpack.c.b16 %v1537, %v1536
      %v1548 = vpack.c.b16 %v1539, %v1538
      %v1549 = vpack.c.b16 %v1541, %v1540
      %1558 = vrot.lane.b32.xlu0 %v248, 121
      %v1559 = vpop.permute.xlu0 %1558
      %v1561 = vmul.f32 %v1176, %v1559
      %v1562 = vmul.f32 %v1177, %v1559
      %v1563 = vmul.f32 %v1178, %v1559
      %v1564 = vmul.f32 %v1179, %v1559
      %v1565 = vmul.f32 %v1180, %v1559
      %v1566 = vmul.f32 %v1181, %v1559
      %v1567 = vmul.f32 %v1182, %v1559
      %v1568 = vmul.f32 %v1183, %v1559
      %v1569 = vmul.f32 %v1184, %v1559
      %v1570 = vmul.f32 %v1185, %v1559
      %v1571 = vmul.f32 %v1186, %v1559
      %v1572 = vmul.f32 %v1187, %v1559
      %v1573 = vmul.f32 %v1188, %v1559
      %v1574 = vmul.f32 %v1189, %v1559
      %v1575 = vmul.f32 %v1190, %v1559
      %v1576 = vmul.f32 %v1191, %v1559
      %v1577 = vmul.f32 %v1192, %v1559
      %v1578 = vmul.f32 %v1193, %v1559
      %v1579 = vmul.f32 %v1194, %v1559
      %v1580 = vmul.f32 %v1195, %v1559
      %v1581 = vmul.f32 %v1196, %v1559
      %v1582 = vmul.f32 %v1197, %v1559
      %v1583 = vmul.f32 %v1198, %v1559
      %v1584 = vmul.f32 %v1199, %v1559
      %v1585 = vmul.f32 %v1200, %v1559
      %v1586 = vmul.f32 %v1201, %v1559
      %v1587 = vmul.f32 %v1202, %v1559
      %v1588 = vmul.f32 %v1203, %v1559
      %v1589 = vmul.f32 %v1204, %v1559
      %v1590 = vmul.f32 %v1205, %v1559
      %v1591 = vmul.f32 %v1206, %v1559
      %v1592 = vmul.f32 %v1207, %v1559
      %v1593 = vpack.c.bf16 %v1562, %v1561
      %v1594 = vpack.c.bf16 %v1564, %v1563
      %v1595 = vpack.c.bf16 %v1566, %v1565
      %v1596 = vpack.c.bf16 %v1568, %v1567
      %v1597 = vpack.c.bf16 %v1570, %v1569
      %v1598 = vpack.c.bf16 %v1572, %v1571
      %v1599 = vpack.c.bf16 %v1574, %v1573
      %v1600 = vpack.c.bf16 %v1576, %v1575
      %v1601 = vpack.c.bf16 %v1578, %v1577
      %v1602 = vpack.c.bf16 %v1580, %v1579
      %v1603 = vpack.c.bf16 %v1582, %v1581
      %v1604 = vpack.c.bf16 %v1584, %v1583
      %v1605 = vpack.c.bf16 %v1586, %v1585
      %v1606 = vpack.c.bf16 %v1588, %v1587
      %v1607 = vpack.c.bf16 %v1590, %v1589
      %v1608 = vpack.c.bf16 %v1592, %v1591
      %1609 = vrot.lane.b32.xlu0 %v245, 127
      %v1610 = vpop.permute.xlu0 %1609
      %v1612 = vmul.f32 %v1176, %v1610
      %v1613 = vmul.f32 %v1177, %v1610
      %v1614 = vmul.f32 %v1178, %v1610
      %v1615 = vmul.f32 %v1179, %v1610
      %v1616 = vmul.f32 %v1180, %v1610
      %v1617 = vmul.f32 %v1181, %v1610
      %v1618 = vmul.f32 %v1182, %v1610
      %v1619 = vmul.f32 %v1183, %v1610
      %v1620 = vmul.f32 %v1184, %v1610
      %v1621 = vmul.f32 %v1185, %v1610
      %v1622 = vmul.f32 %v1186, %v1610
      %v1623 = vmul.f32 %v1187, %v1610
      %v1624 = vmul.f32 %v1188, %v1610
      %v1625 = vmul.f32 %v1189, %v1610
      %v1626 = vmul.f32 %v1190, %v1610
      %v1627 = vmul.f32 %v1191, %v1610
      %v1628 = vmul.f32 %v1192, %v1610
      %v1629 = vmul.f32 %v1193, %v1610
      %v1630 = vmul.f32 %v1194, %v1610
      %v1631 = vmul.f32 %v1195, %v1610
      %v1632 = vmul.f32 %v1196, %v1610
      %v1633 = vmul.f32 %v1197, %v1610
      %v1634 = vmul.f32 %v1198, %v1610
      %v1635 = vmul.f32 %v1199, %v1610
      %v1636 = vmul.f32 %v1200, %v1610
      %v1637 = vmul.f32 %v1201, %v1610
      %v1638 = vmul.f32 %v1202, %v1610
      %v1639 = vmul.f32 %v1203, %v1610
      %v1640 = vmul.f32 %v1204, %v1610
      %v1641 = vmul.f32 %v1205, %v1610
      %v1642 = vmul.f32 %v1206, %v1610
      %v1643 = vmul.f32 %v1207, %v1610
      %v1644 = vpack.c.bf16 %v1613, %v1612
      %v1645 = vpack.c.bf16 %v1615, %v1614
      %v1646 = vpack.c.bf16 %v1617, %v1616
      %v1647 = vpack.c.bf16 %v1619, %v1618
      %v1648 = vpack.c.bf16 %v1621, %v1620
      %v1649 = vpack.c.bf16 %v1623, %v1622
      %v1650 = vpack.c.bf16 %v1625, %v1624
      %v1651 = vpack.c.bf16 %v1627, %v1626
      %v1652 = vpack.c.bf16 %v1629, %v1628
      %v1653 = vpack.c.bf16 %v1631, %v1630
      %v1654 = vpack.c.bf16 %v1633, %v1632
      %v1655 = vpack.c.bf16 %v1635, %v1634
      %v1656 = vpack.c.bf16 %v1637, %v1636
      %v1657 = vpack.c.bf16 %v1639, %v1638
      %v1658 = vpack.c.bf16 %v1641, %v1640
      %v1659 = vpack.c.bf16 %v1643, %v1642
      %v1676 = vunpack.c.l.b16 %v1593
      %v1677 = vunpack.c.h.b16 %v1593
      %v1678 = vunpack.c.l.b16 %v1594
      %v1679 = vunpack.c.h.b16 %v1594
      %v1680 = vunpack.c.l.b16 %v1595
      %v1681 = vunpack.c.h.b16 %v1595
      %v1682 = vunpack.c.l.b16 %v1596
      %v1683 = vunpack.c.h.b16 %v1596
      %v1684 = vunpack.c.l.b16 %v1597
      %v1685 = vunpack.c.h.b16 %v1597
      %v1686 = vunpack.c.l.b16 %v1598
      %v1687 = vunpack.c.h.b16 %v1598
      %v1688 = vunpack.c.l.b16 %v1599
      %v1689 = vunpack.c.h.b16 %v1599
      %v1690 = vunpack.c.l.b16 %v1600
      %v1691 = vunpack.c.h.b16 %v1600
      %v1692 = vunpack.c.l.b16 %v1601
      %v1693 = vunpack.c.h.b16 %v1601
      %v1694 = vunpack.c.l.b16 %v1602
      %v1695 = vunpack.c.h.b16 %v1602
      %v1696 = vunpack.c.l.b16 %v1603
      %v1697 = vunpack.c.h.b16 %v1603
      %v1698 = vunpack.c.l.b16 %v1604
      %v1699 = vunpack.c.h.b16 %v1604
      %v1700 = vunpack.c.l.b16 %v1605
      %v1701 = vunpack.c.h.b16 %v1605
      %v1702 = vunpack.c.l.b16 %v1606
      %v1703 = vunpack.c.h.b16 %v1606
      %v1704 = vunpack.c.l.b16 %v1607
      %v1705 = vunpack.c.h.b16 %v1607
      %v1706 = vunpack.c.l.b16 %v1608
      %v1707 = vunpack.c.h.b16 %v1608
      %v1708 = vpack.c.b16 %v1678, %v1676
      %v1709 = vpack.c.b16 %v1679, %v1677
      %v1710 = vpack.c.b16 %v1682, %v1680
      %v1711 = vpack.c.b16 %v1683, %v1681
      %v1712 = vpack.c.b16 %v1686, %v1684
      %v1713 = vpack.c.b16 %v1687, %v1685
      %v1714 = vpack.c.b16 %v1690, %v1688
      %v1715 = vpack.c.b16 %v1691, %v1689
      %v1716 = vpack.c.b16 %v1694, %v1692
      %v1717 = vpack.c.b16 %v1695, %v1693
      %v1718 = vpack.c.b16 %v1698, %v1696
      %v1719 = vpack.c.b16 %v1699, %v1697
      %v1720 = vpack.c.b16 %v1702, %v1700
      %v1721 = vpack.c.b16 %v1703, %v1701
      %v1722 = vpack.c.b16 %v1706, %v1704
      %v1723 = vpack.c.b16 %v1707, %v1705
      %v1740 = vunpack.c.l.b16 %v1644
      %v1741 = vunpack.c.h.b16 %v1644
      %v1742 = vunpack.c.l.b16 %v1645
      %v1743 = vunpack.c.h.b16 %v1645
      %v1744 = vunpack.c.l.b16 %v1646
      %v1745 = vunpack.c.h.b16 %v1646
      %v1746 = vunpack.c.l.b16 %v1647
      %v1747 = vunpack.c.h.b16 %v1647
      %v1748 = vunpack.c.l.b16 %v1648
      %v1749 = vunpack.c.h.b16 %v1648
      %v1750 = vunpack.c.l.b16 %v1649
      %v1751 = vunpack.c.h.b16 %v1649
      %v1752 = vunpack.c.l.b16 %v1650
      %v1753 = vunpack.c.h.b16 %v1650
      %v1754 = vunpack.c.l.b16 %v1651
      %v1755 = vunpack.c.h.b16 %v1651
      %v1756 = vunpack.c.l.b16 %v1652
      %v1757 = vunpack.c.h.b16 %v1652
      %v1758 = vunpack.c.l.b16 %v1653
      %v1759 = vunpack.c.h.b16 %v1653
      %v1760 = vunpack.c.l.b16 %v1654
      %v1761 = vunpack.c.h.b16 %v1654
      %v1762 = vunpack.c.l.b16 %v1655
      %v1763 = vunpack.c.h.b16 %v1655
      %v1764 = vunpack.c.l.b16 %v1656
      %v1765 = vunpack.c.h.b16 %v1656
      %v1766 = vunpack.c.l.b16 %v1657
      %v1767 = vunpack.c.h.b16 %v1657
      %v1768 = vunpack.c.l.b16 %v1658
      %v1769 = vunpack.c.h.b16 %v1658
      %v1770 = vunpack.c.l.b16 %v1659
      %v1771 = vunpack.c.h.b16 %v1659
      %v1772 = vpack.c.b16 %v1742, %v1740
      %v1773 = vpack.c.b16 %v1743, %v1741
      %v1774 = vpack.c.b16 %v1746, %v1744
      %v1775 = vpack.c.b16 %v1747, %v1745
      %v1776 = vpack.c.b16 %v1750, %v1748
      %v1777 = vpack.c.b16 %v1751, %v1749
      %v1778 = vpack.c.b16 %v1754, %v1752
      %v1779 = vpack.c.b16 %v1755, %v1753
      %v1780 = vpack.c.b16 %v1758, %v1756
      %v1781 = vpack.c.b16 %v1759, %v1757
      %v1782 = vpack.c.b16 %v1762, %v1760
      %v1783 = vpack.c.b16 %v1763, %v1761
      %v1784 = vpack.c.b16 %v1766, %v1764
      %v1785 = vpack.c.b16 %v1767, %v1765
      %v1786 = vpack.c.b16 %v1770, %v1768
      %v1787 = vpack.c.b16 %v1771, %v1769
      %1788 = vrot.lane.b32.xlu0 %v1772, 122
      %v1789 = vpop.permute.xlu0 %1788
      %1790 = vrot.lane.b32.xlu0 %v1773, 122
      %v1791 = vpop.permute.xlu0 %1790
      %1792 = vrot.lane.b32.xlu0 %v1774, 122
      %v1793 = vpop.permute.xlu0 %1792
      %1794 = vrot.lane.b32.xlu0 %v1775, 122
      %v1795 = vpop.permute.xlu0 %1794
      %1796 = vrot.lane.b32.xlu0 %v1776, 122
      %v1797 = vpop.permute.xlu0 %1796
      %1798 = vrot.lane.b32.xlu0 %v1777, 122
      %v1799 = vpop.permute.xlu0 %1798
      %1800 = vrot.lane.b32.xlu0 %v1778, 122
      %v1801 = vpop.permute.xlu0 %1800
      %1802 = vrot.lane.b32.xlu0 %v1779, 122
      %v1803 = vpop.permute.xlu0 %1802
      %1804 = vrot.lane.b32.xlu0 %v1780, 122
      %v1805 = vpop.permute.xlu0 %1804
      %1806 = vrot.lane.b32.xlu0 %v1781, 122
      %v1807 = vpop.permute.xlu0 %1806
      %1808 = vrot.lane.b32.xlu0 %v1782, 122
      %v1809 = vpop.permute.xlu0 %1808
      %1810 = vrot.lane.b32.xlu0 %v1783, 122
      %v1811 = vpop.permute.xlu0 %1810
      %1812 = vrot.lane.b32.xlu0 %v1784, 122
      %v1813 = vpop.permute.xlu0 %1812
      %1814 = vrot.lane.b32.xlu0 %v1785, 122
      %v1815 = vpop.permute.xlu0 %1814
      %1816 = vrot.lane.b32.xlu0 %v1786, 122
      %v1817 = vpop.permute.xlu0 %1816
      %1818 = vrot.lane.b32.xlu0 %v1787, 122
      %v1819 = vpop.permute.xlu0 %1818
      %vm1820 = vcmask 998400
      %v1821 = vsel %vm1820, %v1789, %v1791
      %v1822 = vsel %vm1820, %v1793, %v1795
      %v1823 = vsel %vm1820, %v1797, %v1799
      %v1824 = vsel %vm1820, %v1801, %v1803
      %v1825 = vsel %vm1820, %v1805, %v1807
      %v1826 = vsel %vm1820, %v1809, %v1811
      %v1827 = vsel %vm1820, %v1813, %v1815
      %v1828 = vsel %vm1820, %v1817, %v1819
      %1829 = vrot.lane.b32.xlu0 %v1708, 7
      %v1830 = vpop.permute.xlu0 %1829
      %1831 = vrot.lane.b32.xlu0 %v1709, 7
      %v1832 = vpop.permute.xlu0 %1831
      %1833 = vrot.lane.b32.xlu0 %v1710, 7
      %v1834 = vpop.permute.xlu0 %1833
      %1835 = vrot.lane.b32.xlu0 %v1711, 7
      %v1836 = vpop.permute.xlu0 %1835
      %1837 = vrot.lane.b32.xlu0 %v1712, 7
      %v1838 = vpop.permute.xlu0 %1837
      %1839 = vrot.lane.b32.xlu0 %v1713, 7
      %v1840 = vpop.permute.xlu0 %1839
      %1841 = vrot.lane.b32.xlu0 %v1714, 7
      %v1842 = vpop.permute.xlu0 %1841
      %1843 = vrot.lane.b32.xlu0 %v1715, 7
      %v1844 = vpop.permute.xlu0 %1843
      %1845 = vrot.lane.b32.xlu0 %v1716, 7
      %v1846 = vpop.permute.xlu0 %1845
      %1847 = vrot.lane.b32.xlu0 %v1717, 7
      %v1848 = vpop.permute.xlu0 %1847
      %1849 = vrot.lane.b32.xlu0 %v1718, 7
      %v1850 = vpop.permute.xlu0 %1849
      %1851 = vrot.lane.b32.xlu0 %v1719, 7
      %v1852 = vpop.permute.xlu0 %1851
      %1853 = vrot.lane.b32.xlu0 %v1720, 7
      %v1854 = vpop.permute.xlu0 %1853
      %1855 = vrot.lane.b32.xlu0 %v1721, 7
      %v1856 = vpop.permute.xlu0 %1855
      %1857 = vrot.lane.b32.xlu0 %v1722, 7
      %v1858 = vpop.permute.xlu0 %1857
      %1859 = vrot.lane.b32.xlu0 %v1723, 7
      %v1860 = vpop.permute.xlu0 %1859
      %1861 = vrot.lane.b32.xlu0 %v1821, 7
      %v1862 = vpop.permute.xlu0 %1861
      %1863 = vrot.lane.b32.xlu0 %v1791, 7
      %v1864 = vpop.permute.xlu0 %1863
      %1865 = vrot.lane.b32.xlu0 %v1822, 7
      %v1866 = vpop.permute.xlu0 %1865
      %1867 = vrot.lane.b32.xlu0 %v1795, 7
      %v1868 = vpop.permute.xlu0 %1867
      %1869 = vrot.lane.b32.xlu0 %v1823, 7
      %v1870 = vpop.permute.xlu0 %1869
      %1871 = vrot.lane.b32.xlu0 %v1799, 7
      %v1872 = vpop.permute.xlu0 %1871
      %1873 = vrot.lane.b32.xlu0 %v1824, 7
      %v1874 = vpop.permute.xlu0 %1873
      %1875 = vrot.lane.b32.xlu0 %v1803, 7
      %v1876 = vpop.permute.xlu0 %1875
      %1877 = vrot.lane.b32.xlu0 %v1825, 7
      %v1878 = vpop.permute.xlu0 %1877
      %1879 = vrot.lane.b32.xlu0 %v1807, 7
      %v1880 = vpop.permute.xlu0 %1879
      %1881 = vrot.lane.b32.xlu0 %v1826, 7
      %v1882 = vpop.permute.xlu0 %1881
      %1883 = vrot.lane.b32.xlu0 %v1811, 7
      %v1884 = vpop.permute.xlu0 %1883
      %1885 = vrot.lane.b32.xlu0 %v1827, 7
      %v1886 = vpop.permute.xlu0 %1885
      %1887 = vrot.lane.b32.xlu0 %v1815, 7
      %v1888 = vpop.permute.xlu0 %1887
      %1889 = vrot.lane.b32.xlu0 %v1828, 7
      %v1890 = vpop.permute.xlu0 %1889
      %1891 = vrot.lane.b32.xlu0 %v1819, 7
      %v1892 = vpop.permute.xlu0 %1891
      %vm1893 = vcmask 56320
      %v1894 = vsel %vm1893, %v1830, %v1832
      %v1895 = vsel %vm1893, %v1834, %v1836
      %v1896 = vsel %vm1893, %v1838, %v1840
      %v1897 = vsel %vm1893, %v1842, %v1844
      %v1898 = vsel %vm1893, %v1846, %v1848
      %v1899 = vsel %vm1893, %v1850, %v1852
      %v1900 = vsel %vm1893, %v1854, %v1856
      %v1901 = vsel %vm1893, %v1858, %v1860
      %v1902 = vsel %vm1893, %v1862, %v1864
      %v1903 = vsel %vm1893, %v1866, %v1868
      %v1904 = vsel %vm1893, %v1870, %v1872
      %v1905 = vsel %vm1893, %v1874, %v1876
      %v1906 = vsel %vm1893, %v1878, %v1880
      %v1907 = vsel %vm1893, %v1882, %v1884
      %v1908 = vsel %vm1893, %v1886, %v1888
      %v1909 = vsel %vm1893, %v1890, %v1892
      %1926 = vmatpush.bf16.msra.mxu0 %v1901
      %1927 = vmatpush.bf16.msra.mxu0 %v1900
      %1928 = vmatpush.bf16.msra.mxu0 %v1899
      %1929 = vmatpush.bf16.msra.mxu0 %v1898
      %1930 = vmatpush.bf16.msra.mxu0 %v1897
      %1931 = vmatpush.bf16.msra.mxu0 %v1896
      %1932 = vmatpush.bf16.msra.mxu0 %v1895
      %1933 = vmatpush.bf16.msra.mxu0 %v1894
      %1934 = vmatmul.bf16.gmra.mxu0 %v1494
      %v1935 = vpop.f32.mrf.mxu0
      %v1936 = vadd.f32 0.0, %v1935
      %v1937 = vpop.f32.mrf.mxu0
      %1938 = vmatmul.bf16.gmra.mxu0 %v1495
      %v1939 = vpop.f32.mrf.mxu0
      %v1940 = vpop.f32.mrf.mxu0
      %1941 = vmatmul.bf16.gmra.mxu0 %v1496
      %v1942 = vpop.f32.mrf.mxu0
      %v1943 = vpop.f32.mrf.mxu0
      %1944 = vmatmul.bf16.gmra.mxu0 %v1497
      %v1945 = vpop.f32.mrf.mxu0
      %v1946 = vpop.f32.mrf.mxu0
      %1947 = vmatmul.bf16.gmra.mxu0 %v1498
      %v1948 = vpop.f32.mrf.mxu0
      %v1949 = vpop.f32.mrf.mxu0
      %1950 = vmatmul.bf16.gmra.mxu0 %v1499
      %v1951 = vpop.f32.mrf.mxu0
      %v1952 = vpop.f32.mrf.mxu0
      %1953 = vmatmul.bf16.gmra.mxu0 %v1500
      %v1954 = vpop.f32.mrf.mxu0
      %v1955 = vpop.f32.mrf.mxu0
      %1956 = vmatmul.bf16.gmra.mxu0 %v1501
      %v1957 = vpop.f32.mrf.mxu0
      %v1958 = vpop.f32.mrf.mxu0
      %1959 = vdwg.mxu0
      %1960 = vmatpush.bf16.msra.mxu0 %v1909
      %1961 = vmatpush.bf16.msra.mxu0 %v1908
      %1962 = vmatpush.bf16.msra.mxu0 %v1907
      %1963 = vmatpush.bf16.msra.mxu0 %v1906
      %1964 = vmatpush.bf16.msra.mxu0 %v1905
      %1965 = vmatpush.bf16.msra.mxu0 %v1904
      %1966 = vmatpush.bf16.msra.mxu0 %v1903
      %1967 = vmatpush.bf16.msra.mxu0 %v1902
      %1968 = vmatmul.bf16.gmra.mxu0 %v1542
      %v1969 = vpop.f32.mrf.mxu0
      %v1970 = vadd.f32 %v1936, %v1969
      %v1971 = vpop.f32.mrf.mxu0
      %1972 = vmatmul.bf16.gmra.mxu0 %v1543
      %v1973 = vpop.f32.mrf.mxu0
      %v1974 = vpop.f32.mrf.mxu0
      %1975 = vmatmul.bf16.gmra.mxu0 %v1544
      %v1976 = vpop.f32.mrf.mxu0
      %v1977 = vpop.f32.mrf.mxu0
      %1978 = vmatmul.bf16.gmra.mxu0 %v1545
      %v1979 = vpop.f32.mrf.mxu0
      %v1980 = vpop.f32.mrf.mxu0
      %1981 = vmatmul.bf16.gmra.mxu0 %v1546
      %v1982 = vpop.f32.mrf.mxu0
      %v1983 = vpop.f32.mrf.mxu0
      %1984 = vmatmul.bf16.gmra.mxu0 %v1547
      %v1985 = vpop.f32.mrf.mxu0
      %v1986 = vpop.f32.mrf.mxu0
      %1987 = vmatmul.bf16.gmra.mxu0 %v1548
      %v1988 = vpop.f32.mrf.mxu0
      %v1989 = vpop.f32.mrf.mxu0
      %1990 = vmatmul.bf16.gmra.mxu0 %v1549
      %v1991 = vpop.f32.mrf.mxu0
      %v1992 = vpop.f32.mrf.mxu0
      %1993 = vdwg.mxu0
      %1994 = vrot.lane.b32.xlu0 %v1307, 9
      %v1995 = vpop.permute.xlu0 %1994
      %1996 = vrot.lane.b32.xlu0 %v1308, 9
      %v1997 = vpop.permute.xlu0 %1996
      %1998 = vrot.lane.b32.xlu0 %v1309, 9
      %v1999 = vpop.permute.xlu0 %1998
      %2000 = vrot.lane.b32.xlu0 %v1310, 9
      %v2001 = vpop.permute.xlu0 %2000
      %2002 = vrot.lane.b32.xlu0 %v1311, 9
      %v2003 = vpop.permute.xlu0 %2002
      %2004 = vrot.lane.b32.xlu0 %v1312, 9
      %v2005 = vpop.permute.xlu0 %2004
      %2006 = vrot.lane.b32.xlu0 %v1313, 9
      %v2007 = vpop.permute.xlu0 %2006
      %2008 = vrot.lane.b32.xlu0 %v1314, 9
      %v2009 = vpop.permute.xlu0 %2008
      %2010 = vrot.lane.b32.xlu0 %v1315, 9
      %v2011 = vpop.permute.xlu0 %2010
      %2012 = vrot.lane.b32.xlu0 %v1316, 9
      %v2013 = vpop.permute.xlu0 %2012
      %2014 = vrot.lane.b32.xlu0 %v1317, 9
      %v2015 = vpop.permute.xlu0 %2014
      %2016 = vrot.lane.b32.xlu0 %v1318, 9
      %v2017 = vpop.permute.xlu0 %2016
      %2018 = vrot.lane.b32.xlu0 %v1319, 9
      %v2019 = vpop.permute.xlu0 %2018
      %2020 = vrot.lane.b32.xlu0 %v1320, 9
      %v2021 = vpop.permute.xlu0 %2020
      %2022 = vrot.lane.b32.xlu0 %v1321, 9
      %v2023 = vpop.permute.xlu0 %2022
      %2024 = vrot.lane.b32.xlu0 %v1322, 9
      %v2025 = vpop.permute.xlu0 %2024
      %2026 = vrot.lane.b32.xlu0 %v1420, 9
      %v2027 = vpop.permute.xlu0 %2026
      %2028 = vrot.lane.b32.xlu0 %v1390, 9
      %v2029 = vpop.permute.xlu0 %2028
      %2030 = vrot.lane.b32.xlu0 %v1421, 9
      %v2031 = vpop.permute.xlu0 %2030
      %2032 = vrot.lane.b32.xlu0 %v1394, 9
      %v2033 = vpop.permute.xlu0 %2032
      %2034 = vrot.lane.b32.xlu0 %v1422, 9
      %v2035 = vpop.permute.xlu0 %2034
      %2036 = vrot.lane.b32.xlu0 %v1398, 9
      %v2037 = vpop.permute.xlu0 %2036
      %2038 = vrot.lane.b32.xlu0 %v1423, 9
      %v2039 = vpop.permute.xlu0 %2038
      %2040 = vrot.lane.b32.xlu0 %v1402, 9
      %v2041 = vpop.permute.xlu0 %2040
      %2042 = vrot.lane.b32.xlu0 %v1424, 9
      %v2043 = vpop.permute.xlu0 %2042
      %2044 = vrot.lane.b32.xlu0 %v1406, 9
      %v2045 = vpop.permute.xlu0 %2044
      %2046 = vrot.lane.b32.xlu0 %v1425, 9
      %v2047 = vpop.permute.xlu0 %2046
      %2048 = vrot.lane.b32.xlu0 %v1410, 9
      %v2049 = vpop.permute.xlu0 %2048
      %2050 = vrot.lane.b32.xlu0 %v1426, 9
      %v2051 = vpop.permute.xlu0 %2050
      %2052 = vrot.lane.b32.xlu0 %v1414, 9
      %v2053 = vpop.permute.xlu0 %2052
      %2054 = vrot.lane.b32.xlu0 %v1427, 9
      %v2055 = vpop.permute.xlu0 %2054
      %2056 = vrot.lane.b32.xlu0 %v1418, 9
      %v2057 = vpop.permute.xlu0 %2056
      %vm2058 = vcmask 72704
      %v2059 = vsel %vm2058, %v1995, %v1997
      %v2060 = vsel %vm2058, %v1999, %v2001
      %v2061 = vsel %vm2058, %v2003, %v2005
      %v2062 = vsel %vm2058, %v2007, %v2009
      %v2063 = vsel %vm2058, %v2011, %v2013
      %v2064 = vsel %vm2058, %v2015, %v2017
      %v2065 = vsel %vm2058, %v2019, %v2021
      %v2066 = vsel %vm2058, %v2023, %v2025
      %v2067 = vsel %vm2058, %v2027, %v2029
      %v2068 = vsel %vm2058, %v2031, %v2033
      %v2069 = vsel %vm2058, %v2035, %v2037
      %v2070 = vsel %vm2058, %v2039, %v2041
      %v2071 = vsel %vm2058, %v2043, %v2045
      %v2072 = vsel %vm2058, %v2047, %v2049
      %v2073 = vsel %vm2058, %v2051, %v2053
      %v2074 = vsel %vm2058, %v2055, %v2057
      %2091 = vmatpush.bf16.msra.mxu0 %v2066
      %2092 = vmatpush.bf16.msra.mxu0 %v2065
      %2093 = vmatpush.bf16.msra.mxu0 %v2064
      %2094 = vmatpush.bf16.msra.mxu0 %v2063
      %2095 = vmatpush.bf16.msra.mxu0 %v2062
      %2096 = vmatpush.bf16.msra.mxu0 %v2061
      %2097 = vmatpush.bf16.msra.mxu0 %v2060
      %2098 = vmatpush.bf16.msra.mxu0 %v2059
      %2099 = vmatmul.bf16.gmra.mxu0 %v1096
      %v2100 = vpop.f32.mrf.mxu0
      %v2101 = vadd.f32 %v1970, %v2100
      %v2102 = vpop.f32.mrf.mxu0
      %2103 = vmatmul.bf16.gmra.mxu0 %v1097
      %v2104 = vpop.f32.mrf.mxu0
      %v2105 = vpop.f32.mrf.mxu0
      %2106 = vmatmul.bf16.gmra.mxu0 %v1098
      %v2107 = vpop.f32.mrf.mxu0
      %v2108 = vpop.f32.mrf.mxu0
      %2109 = vmatmul.bf16.gmra.mxu0 %v1099
      %v2110 = vpop.f32.mrf.mxu0
      %v2111 = vpop.f32.mrf.mxu0
      %2112 = vmatmul.bf16.gmra.mxu0 %v1100
      %v2113 = vpop.f32.mrf.mxu0
      %v2114 = vpop.f32.mrf.mxu0
      %2115 = vmatmul.bf16.gmra.mxu0 %v1101
      %v2116 = vpop.f32.mrf.mxu0
      %v2117 = vpop.f32.mrf.mxu0
      %2118 = vmatmul.bf16.gmra.mxu0 %v1102
      %v2119 = vpop.f32.mrf.mxu0
      %v2120 = vpop.f32.mrf.mxu0
      %2121 = vmatmul.bf16.gmra.mxu0 %v1103
      %v2122 = vpop.f32.mrf.mxu0
      %v2123 = vpop.f32.mrf.mxu0
      %2124 = vdwg.mxu0
      %2125 = vmatpush.bf16.msra.mxu0 %v2074
      %2126 = vmatpush.bf16.msra.mxu0 %v2073
      %2127 = vmatpush.bf16.msra.mxu0 %v2072
      %2128 = vmatpush.bf16.msra.mxu0 %v2071
      %2129 = vmatpush.bf16.msra.mxu0 %v2070
      %2130 = vmatpush.bf16.msra.mxu0 %v2069
      %2131 = vmatpush.bf16.msra.mxu0 %v2068
      %2132 = vmatpush.bf16.msra.mxu0 %v2067
      %2133 = vmatmul.bf16.gmra.mxu0 %v1144
      %v2134 = vpop.f32.mrf.mxu0
      %v2135 = vadd.f32 %v2101, %v2134
      %v2136 = vpop.f32.mrf.mxu0
      %2137 = vmatmul.bf16.gmra.mxu0 %v1145
      %v2138 = vpop.f32.mrf.mxu0
      %v2139 = vpop.f32.mrf.mxu0
      %2140 = vmatmul.bf16.gmra.mxu0 %v1146
      %v2141 = vpop.f32.mrf.mxu0
      %v2142 = vpop.f32.mrf.mxu0
      %2143 = vmatmul.bf16.gmra.mxu0 %v1147
      %v2144 = vpop.f32.mrf.mxu0
      %v2145 = vpop.f32.mrf.mxu0
      %2146 = vmatmul.bf16.gmra.mxu0 %v1148
      %v2147 = vpop.f32.mrf.mxu0
      %v2148 = vpop.f32.mrf.mxu0
      %2149 = vmatmul.bf16.gmra.mxu0 %v1149
      %v2150 = vpop.f32.mrf.mxu0
      %v2151 = vpop.f32.mrf.mxu0
      %2152 = vmatmul.bf16.gmra.mxu0 %v1150
      %v2153 = vpop.f32.mrf.mxu0
      %v2154 = vpop.f32.mrf.mxu0
      %2155 = vmatmul.bf16.gmra.mxu0 %v1151
      %v2156 = vpop.f32.mrf.mxu0
      %v2157 = vpop.f32.mrf.mxu0
      %2158 = vdwg.mxu0
      %s2159 = scalar_lea.vmem %s3, 256
      %v2160 = vld [vmem:[%s2159] sm:$0xf]
      %v2161 = vld [vmem:[%s2159 + $0x4] sm:$0xf]
      %v2162 = vld [vmem:[%s2159 + $0x8] sm:$0xf]
      %v2163 = vld [vmem:[%s2159 + $0xc] sm:$0xf]
      %v2164 = vld [vmem:[%s2159 + $0x10] sm:$0xf]
      %v2165 = vld [vmem:[%s2159 + $0x14] sm:$0xf]
      %v2166 = vld [vmem:[%s2159 + $0x18] sm:$0xf]
      %v2167 = vld [vmem:[%s2159 + $0x1c] sm:$0xf]
      %v2168 = vld [vmem:[%s2159 + $0x20] sm:$0xf]
      %v2169 = vld [vmem:[%s2159 + $0x24] sm:$0xf]
      %v2170 = vld [vmem:[%s2159 + $0x28] sm:$0xf]
      %v2171 = vld [vmem:[%s2159 + $0x2c] sm:$0xf]
      %v2172 = vld [vmem:[%s2159 + $0x30] sm:$0xf]
      %v2173 = vld [vmem:[%s2159 + $0x34] sm:$0xf]
      %v2174 = vld [vmem:[%s2159 + $0x38] sm:$0xf]
      %v2175 = vld [vmem:[%s2159 + $0x3c] sm:$0xf]
      %s2176 = scalar_lea.vmem %s3, 320
      %v2177 = vld [vmem:[%s2176] sm:$0xf]
      %v2178 = vld [vmem:[%s2176 + $0x4] sm:$0xf]
      %v2179 = vld [vmem:[%s2176 + $0x8] sm:$0xf]
      %v2180 = vld [vmem:[%s2176 + $0xc] sm:$0xf]
      %v2181 = vld [vmem:[%s2176 + $0x10] sm:$0xf]
      %v2182 = vld [vmem:[%s2176 + $0x14] sm:$0xf]
      %v2183 = vld [vmem:[%s2176 + $0x18] sm:$0xf]
      %v2184 = vld [vmem:[%s2176 + $0x1c] sm:$0xf]
      %v2185 = vld [vmem:[%s2176 + $0x20] sm:$0xf]
      %v2186 = vld [vmem:[%s2176 + $0x24] sm:$0xf]
      %v2187 = vld [vmem:[%s2176 + $0x28] sm:$0xf]
      %v2188 = vld [vmem:[%s2176 + $0x2c] sm:$0xf]
      %v2189 = vld [vmem:[%s2176 + $0x30] sm:$0xf]
      %v2190 = vld [vmem:[%s2176 + $0x34] sm:$0xf]
      %v2191 = vld [vmem:[%s2176 + $0x38] sm:$0xf]
      %v2192 = vld [vmem:[%s2176 + $0x3c] sm:$0xf]
      %v2209 = vunpack.c.l.b16 %v2160
      %v2210 = vunpack.c.l.b16 %v2161
      %v2211 = vunpack.c.l.b16 %v2162
      %v2212 = vunpack.c.l.b16 %v2163
      %v2213 = vunpack.c.l.b16 %v2164
      %v2214 = vunpack.c.l.b16 %v2165
      %v2215 = vunpack.c.l.b16 %v2166
      %v2216 = vunpack.c.l.b16 %v2167
      %v2217 = vunpack.c.l.b16 %v2168
      %v2218 = vunpack.c.l.b16 %v2169
      %v2219 = vunpack.c.l.b16 %v2170
      %v2220 = vunpack.c.l.b16 %v2171
      %v2221 = vunpack.c.l.b16 %v2172
      %v2222 = vunpack.c.l.b16 %v2173
      %v2223 = vunpack.c.l.b16 %v2174
      %v2224 = vunpack.c.l.b16 %v2175
      %v2225 = vpack.c.b16 %v2210, %v2209
      %v2226 = vpack.c.b16 %v2212, %v2211
      %v2227 = vpack.c.b16 %v2214, %v2213
      %v2228 = vpack.c.b16 %v2216, %v2215
      %v2229 = vpack.c.b16 %v2218, %v2217
      %v2230 = vpack.c.b16 %v2220, %v2219
      %v2231 = vpack.c.b16 %v2222, %v2221
      %v2232 = vpack.c.b16 %v2224, %v2223
      %v2257 = vunpack.c.l.b16 %v2177
      %v2258 = vunpack.c.l.b16 %v2178
      %v2259 = vunpack.c.l.b16 %v2179
      %v2260 = vunpack.c.l.b16 %v2180
      %v2261 = vunpack.c.l.b16 %v2181
      %v2262 = vunpack.c.l.b16 %v2182
      %v2263 = vunpack.c.l.b16 %v2183
      %v2264 = vunpack.c.l.b16 %v2184
      %v2265 = vunpack.c.l.b16 %v2185
      %v2266 = vunpack.c.l.b16 %v2186
      %v2267 = vunpack.c.l.b16 %v2187
      %v2268 = vunpack.c.l.b16 %v2188
      %v2269 = vunpack.c.l.b16 %v2189
      %v2270 = vunpack.c.l.b16 %v2190
      %v2271 = vunpack.c.l.b16 %v2191
      %v2272 = vunpack.c.l.b16 %v2192
      %v2273 = vpack.c.b16 %v2258, %v2257
      %v2274 = vpack.c.b16 %v2260, %v2259
      %v2275 = vpack.c.b16 %v2262, %v2261
      %v2276 = vpack.c.b16 %v2264, %v2263
      %v2277 = vpack.c.b16 %v2266, %v2265
      %v2278 = vpack.c.b16 %v2268, %v2267
      %v2279 = vpack.c.b16 %v2270, %v2269
      %v2280 = vpack.c.b16 %v2272, %v2271
      %v2289 = vld [vmem:[#allocation2 + $0x4] sm:$0xf]
      %v2290 = vld [vmem:[#allocation2 + $0xc] sm:$0xf]
      %v2291 = vld [vmem:[#allocation2 + $0x14] sm:$0xf]
      %v2292 = vld [vmem:[#allocation2 + $0x1c] sm:$0xf]
      %v2293 = vld [vmem:[#allocation2 + $0x24] sm:$0xf]
      %v2294 = vld [vmem:[#allocation2 + $0x2c] sm:$0xf]
      %v2295 = vld [vmem:[#allocation2 + $0x34] sm:$0xf]
      %v2296 = vld [vmem:[#allocation2 + $0x3c] sm:$0xf]
      %v2297 = vld [vmem:[#allocation2 + $0x44] sm:$0xf]
      %v2298 = vld [vmem:[#allocation2 + $0x4c] sm:$0xf]
      %v2299 = vld [vmem:[#allocation2 + $0x54] sm:$0xf]
      %v2300 = vld [vmem:[#allocation2 + $0x5c] sm:$0xf]
      %v2301 = vld [vmem:[#allocation2 + $0x64] sm:$0xf]
      %v2302 = vld [vmem:[#allocation2 + $0x6c] sm:$0xf]
      %v2303 = vld [vmem:[#allocation2 + $0x74] sm:$0xf]
      %v2304 = vld [vmem:[#allocation2 + $0x7c] sm:$0xf]
      %v2305 = vunpack.c.l.bf16 %v2289
      %v2306 = vunpack.c.l.bf16 %v2290
      %v2307 = vunpack.c.l.bf16 %v2291
      %v2308 = vunpack.c.l.bf16 %v2292
      %v2309 = vunpack.c.l.bf16 %v2293
      %v2310 = vunpack.c.l.bf16 %v2294
      %v2311 = vunpack.c.l.bf16 %v2295
      %v2312 = vunpack.c.l.bf16 %v2296
      %v2313 = vunpack.c.l.bf16 %v2297
      %v2314 = vunpack.c.l.bf16 %v2298
      %v2315 = vunpack.c.l.bf16 %v2299
      %v2316 = vunpack.c.l.bf16 %v2300
      %v2317 = vunpack.c.l.bf16 %v2301
      %v2318 = vunpack.c.l.bf16 %v2302
      %v2319 = vunpack.c.l.bf16 %v2303
      %v2320 = vunpack.c.l.bf16 %v2304
      %2321 = vrot.lane.b32.xlu0 %v248, 1
      %v2322 = vpop.permute.xlu0 %2321
      %v2324 = vmul.f32 %v2305, %v2322
      %v2325 = vmul.f32 %v2306, %v2322
      %v2326 = vmul.f32 %v2307, %v2322
      %v2327 = vmul.f32 %v2308, %v2322
      %v2328 = vmul.f32 %v2309, %v2322
      %v2329 = vmul.f32 %v2310, %v2322
      %v2330 = vmul.f32 %v2311, %v2322
      %v2331 = vmul.f32 %v2312, %v2322
      %v2332 = vmul.f32 %v2313, %v2322
      %v2333 = vmul.f32 %v2314, %v2322
      %v2334 = vmul.f32 %v2315, %v2322
      %v2335 = vmul.f32 %v2316, %v2322
      %v2336 = vmul.f32 %v2317, %v2322
      %v2337 = vmul.f32 %v2318, %v2322
      %v2338 = vmul.f32 %v2319, %v2322
      %v2339 = vmul.f32 %v2320, %v2322
      %v2340 = vpack.c.bf16 %v2324, %v2324
      %v2341 = vpack.c.bf16 %v2325, %v2325
      %v2342 = vpack.c.bf16 %v2326, %v2326
      %v2343 = vpack.c.bf16 %v2327, %v2327
      %v2344 = vpack.c.bf16 %v2328, %v2328
      %v2345 = vpack.c.bf16 %v2329, %v2329
      %v2346 = vpack.c.bf16 %v2330, %v2330
      %v2347 = vpack.c.bf16 %v2331, %v2331
      %v2348 = vpack.c.bf16 %v2332, %v2332
      %v2349 = vpack.c.bf16 %v2333, %v2333
      %v2350 = vpack.c.bf16 %v2334, %v2334
      %v2351 = vpack.c.bf16 %v2335, %v2335
      %v2352 = vpack.c.bf16 %v2336, %v2336
      %v2353 = vpack.c.bf16 %v2337, %v2337
      %v2354 = vpack.c.bf16 %v2338, %v2338
      %v2355 = vpack.c.bf16 %v2339, %v2339
      %v2372 = vunpack.c.l.b16 %v2289
      %v2373 = vunpack.c.l.b16 %v2290
      %v2374 = vunpack.c.l.b16 %v2291
      %v2375 = vunpack.c.l.b16 %v2292
      %v2376 = vunpack.c.l.b16 %v2293
      %v2377 = vunpack.c.l.b16 %v2294
      %v2378 = vunpack.c.l.b16 %v2295
      %v2379 = vunpack.c.l.b16 %v2296
      %v2380 = vunpack.c.l.b16 %v2297
      %v2381 = vunpack.c.l.b16 %v2298
      %v2382 = vunpack.c.l.b16 %v2299
      %v2383 = vunpack.c.l.b16 %v2300
      %v2384 = vunpack.c.l.b16 %v2301
      %v2385 = vunpack.c.l.b16 %v2302
      %v2386 = vunpack.c.l.b16 %v2303
      %v2387 = vunpack.c.l.b16 %v2304
      %v2388 = vpack.c.b16 %v2373, %v2372
      %v2389 = vpack.c.b16 %v2375, %v2374
      %v2390 = vpack.c.b16 %v2377, %v2376
      %v2391 = vpack.c.b16 %v2379, %v2378
      %v2392 = vpack.c.b16 %v2381, %v2380
      %v2393 = vpack.c.b16 %v2383, %v2382
      %v2394 = vpack.c.b16 %v2385, %v2384
      %v2395 = vpack.c.b16 %v2387, %v2386
      %v2420 = vunpack.c.l.b16 %v2340
      %v2421 = vunpack.c.l.b16 %v2341
      %v2422 = vunpack.c.l.b16 %v2342
      %v2423 = vunpack.c.l.b16 %v2343
      %v2424 = vunpack.c.l.b16 %v2344
      %v2425 = vunpack.c.l.b16 %v2345
      %v2426 = vunpack.c.l.b16 %v2346
      %v2427 = vunpack.c.l.b16 %v2347
      %v2428 = vunpack.c.l.b16 %v2348
      %v2429 = vunpack.c.l.b16 %v2349
      %v2430 = vunpack.c.l.b16 %v2350
      %v2431 = vunpack.c.l.b16 %v2351
      %v2432 = vunpack.c.l.b16 %v2352
      %v2433 = vunpack.c.l.b16 %v2353
      %v2434 = vunpack.c.l.b16 %v2354
      %v2435 = vunpack.c.l.b16 %v2355
      %v2436 = vpack.c.b16 %v2421, %v2420
      %v2437 = vpack.c.b16 %v2423, %v2422
      %v2438 = vpack.c.b16 %v2425, %v2424
      %v2439 = vpack.c.b16 %v2427, %v2426
      %v2440 = vpack.c.b16 %v2429, %v2428
      %v2441 = vpack.c.b16 %v2431, %v2430
      %v2442 = vpack.c.b16 %v2433, %v2432
      %v2443 = vpack.c.b16 %v2435, %v2434
      %2444 = vrot.lane.b32.xlu0 %v2436, 127
      %v2445 = vpop.permute.xlu0 %2444
      %2446 = vrot.lane.b32.xlu0 %v2437, 127
      %v2447 = vpop.permute.xlu0 %2446
      %2448 = vrot.lane.b32.xlu0 %v2438, 127
      %v2449 = vpop.permute.xlu0 %2448
      %2450 = vrot.lane.b32.xlu0 %v2439, 127
      %v2451 = vpop.permute.xlu0 %2450
      %2452 = vrot.lane.b32.xlu0 %v2440, 127
      %v2453 = vpop.permute.xlu0 %2452
      %2454 = vrot.lane.b32.xlu0 %v2441, 127
      %v2455 = vpop.permute.xlu0 %2454
      %2456 = vrot.lane.b32.xlu0 %v2442, 127
      %v2457 = vpop.permute.xlu0 %2456
      %2458 = vrot.lane.b32.xlu0 %v2443, 127
      %v2459 = vpop.permute.xlu0 %2458
      %2468 = vmatpush.bf16.msra.mxu0 %v2395
      %2469 = vmatpush.bf16.msra.mxu0 %v2394
      %2470 = vmatpush.bf16.msra.mxu0 %v2393
      %2471 = vmatpush.bf16.msra.mxu0 %v2392
      %2472 = vmatpush.bf16.msra.mxu0 %v2391
      %2473 = vmatpush.bf16.msra.mxu0 %v2390
      %2474 = vmatpush.bf16.msra.mxu0 %v2389
      %2475 = vmatpush.bf16.msra.mxu0 %v2388
      %2476 = vmatmul.bf16.gmra.mxu0 %v2225
      %v2477 = vpop.f32.mrf.mxu0
      %v2478 = vadd.f32 0.0, %v2477
      %v2479 = vpop.f32.mrf.mxu0
      %2480 = vmatmul.bf16.gmra.mxu0 %v2226
      %v2481 = vpop.f32.mrf.mxu0
      %v2482 = vpop.f32.mrf.mxu0
      %2483 = vmatmul.bf16.gmra.mxu0 %v2227
      %v2484 = vpop.f32.mrf.mxu0
      %v2485 = vpop.f32.mrf.mxu0
      %2486 = vmatmul.bf16.gmra.mxu0 %v2228
      %v2487 = vpop.f32.mrf.mxu0
      %v2488 = vpop.f32.mrf.mxu0
      %2489 = vmatmul.bf16.gmra.mxu0 %v2229
      %v2490 = vpop.f32.mrf.mxu0
      %v2491 = vpop.f32.mrf.mxu0
      %2492 = vmatmul.bf16.gmra.mxu0 %v2230
      %v2493 = vpop.f32.mrf.mxu0
      %v2494 = vpop.f32.mrf.mxu0
      %2495 = vmatmul.bf16.gmra.mxu0 %v2231
      %v2496 = vpop.f32.mrf.mxu0
      %v2497 = vpop.f32.mrf.mxu0
      %2498 = vmatmul.bf16.gmra.mxu0 %v2232
      %v2499 = vpop.f32.mrf.mxu0
      %v2500 = vpop.f32.mrf.mxu0
      %2501 = vdwg.mxu0
      %2502 = vmatpush.bf16.msra.mxu0 %v2459
      %2503 = vmatpush.bf16.msra.mxu0 %v2457
      %2504 = vmatpush.bf16.msra.mxu0 %v2455
      %2505 = vmatpush.bf16.msra.mxu0 %v2453
      %2506 = vmatpush.bf16.msra.mxu0 %v2451
      %2507 = vmatpush.bf16.msra.mxu0 %v2449
      %2508 = vmatpush.bf16.msra.mxu0 %v2447
      %2509 = vmatpush.bf16.msra.mxu0 %v2445
      %2510 = vmatmul.bf16.gmra.mxu0 %v2273
      %v2511 = vpop.f32.mrf.mxu0
      %v2512 = vadd.f32 %v2478, %v2511
      %v2513 = vpop.f32.mrf.mxu0
      %2514 = vmatmul.bf16.gmra.mxu0 %v2274
      %v2515 = vpop.f32.mrf.mxu0
      %v2516 = vpop.f32.mrf.mxu0
      %2517 = vmatmul.bf16.gmra.mxu0 %v2275
      %v2518 = vpop.f32.mrf.mxu0
      %v2519 = vpop.f32.mrf.mxu0
      %2520 = vmatmul.bf16.gmra.mxu0 %v2276
      %v2521 = vpop.f32.mrf.mxu0
      %v2522 = vpop.f32.mrf.mxu0
      %2523 = vmatmul.bf16.gmra.mxu0 %v2277
      %v2524 = vpop.f32.mrf.mxu0
      %v2525 = vpop.f32.mrf.mxu0
      %2526 = vmatmul.bf16.gmra.mxu0 %v2278
      %v2527 = vpop.f32.mrf.mxu0
      %v2528 = vpop.f32.mrf.mxu0
      %2529 = vmatmul.bf16.gmra.mxu0 %v2279
      %v2530 = vpop.f32.mrf.mxu0
      %v2531 = vpop.f32.mrf.mxu0
      %2532 = vmatmul.bf16.gmra.mxu0 %v2280
      %v2533 = vpop.f32.mrf.mxu0
      %v2534 = vpop.f32.mrf.mxu0
      %2535 = vdwg.mxu0
      %v2536 = vadd.f32 %v2135, %v2512
      %s2537 = scalar_lea.vmem %s3, 384
      %v2538 = vld [vmem:[%s2537] sm:$0xf]
      %v2539 = vld [vmem:[%s2537 + $0x4] sm:$0xf]
      %v2540 = vld [vmem:[%s2537 + $0x8] sm:$0xf]
      %v2541 = vld [vmem:[%s2537 + $0xc] sm:$0xf]
      %v2542 = vld [vmem:[%s2537 + $0x10] sm:$0xf]
      %v2543 = vld [vmem:[%s2537 + $0x14] sm:$0xf]
      %v2544 = vld [vmem:[%s2537 + $0x18] sm:$0xf]
      %v2545 = vld [vmem:[%s2537 + $0x1c] sm:$0xf]
      %v2546 = vld [vmem:[%s2537 + $0x20] sm:$0xf]
      %v2547 = vld [vmem:[%s2537 + $0x24] sm:$0xf]
      %v2548 = vld [vmem:[%s2537 + $0x28] sm:$0xf]
      %v2549 = vld [vmem:[%s2537 + $0x2c] sm:$0xf]
      %v2550 = vld [vmem:[%s2537 + $0x30] sm:$0xf]
      %v2551 = vld [vmem:[%s2537 + $0x34] sm:$0xf]
      %v2552 = vld [vmem:[%s2537 + $0x38] sm:$0xf]
      %v2553 = vld [vmem:[%s2537 + $0x3c] sm:$0xf]
      %s2554 = scalar_lea.vmem %s3, 448
      %v2555 = vld [vmem:[%s2554] sm:$0xf]
      %v2556 = vld [vmem:[%s2554 + $0x4] sm:$0xf]
      %v2557 = vld [vmem:[%s2554 + $0x8] sm:$0xf]
      %v2558 = vld [vmem:[%s2554 + $0xc] sm:$0xf]
      %v2559 = vld [vmem:[%s2554 + $0x10] sm:$0xf]
      %v2560 = vld [vmem:[%s2554 + $0x14] sm:$0xf]
      %v2561 = vld [vmem:[%s2554 + $0x18] sm:$0xf]
      %v2562 = vld [vmem:[%s2554 + $0x1c] sm:$0xf]
      %v2563 = vld [vmem:[%s2554 + $0x20] sm:$0xf]
      %v2564 = vld [vmem:[%s2554 + $0x24] sm:$0xf]
      %v2565 = vld [vmem:[%s2554 + $0x28] sm:$0xf]
      %v2566 = vld [vmem:[%s2554 + $0x2c] sm:$0xf]
      %v2567 = vld [vmem:[%s2554 + $0x30] sm:$0xf]
      %v2568 = vld [vmem:[%s2554 + $0x34] sm:$0xf]
      %v2569 = vld [vmem:[%s2554 + $0x38] sm:$0xf]
      %v2570 = vld [vmem:[%s2554 + $0x3c] sm:$0xf]
      %v2587 = vunpack.c.l.b16 %v2538
      %v2588 = vunpack.c.l.b16 %v2539
      %v2589 = vunpack.c.l.b16 %v2540
      %v2590 = vunpack.c.l.b16 %v2541
      %v2591 = vunpack.c.l.b16 %v2542
      %v2592 = vunpack.c.l.b16 %v2543
      %v2593 = vunpack.c.l.b16 %v2544
      %v2594 = vunpack.c.l.b16 %v2545
      %v2595 = vunpack.c.l.b16 %v2546
      %v2596 = vunpack.c.l.b16 %v2547
      %v2597 = vunpack.c.l.b16 %v2548
      %v2598 = vunpack.c.l.b16 %v2549
      %v2599 = vunpack.c.l.b16 %v2550
      %v2600 = vunpack.c.l.b16 %v2551
      %v2601 = vunpack.c.l.b16 %v2552
      %v2602 = vunpack.c.l.b16 %v2553
      %v2603 = vpack.c.b16 %v2588, %v2587
      %v2604 = vpack.c.b16 %v2590, %v2589
      %v2605 = vpack.c.b16 %v2592, %v2591
      %v2606 = vpack.c.b16 %v2594, %v2593
      %v2607 = vpack.c.b16 %v2596, %v2595
      %v2608 = vpack.c.b16 %v2598, %v2597
      %v2609 = vpack.c.b16 %v2600, %v2599
      %v2610 = vpack.c.b16 %v2602, %v2601
      %v2635 = vunpack.c.l.b16 %v2555
      %v2636 = vunpack.c.l.b16 %v2556
      %v2637 = vunpack.c.l.b16 %v2557
      %v2638 = vunpack.c.l.b16 %v2558
      %v2639 = vunpack.c.l.b16 %v2559
      %v2640 = vunpack.c.l.b16 %v2560
      %v2641 = vunpack.c.l.b16 %v2561
      %v2642 = vunpack.c.l.b16 %v2562
      %v2643 = vunpack.c.l.b16 %v2563
      %v2644 = vunpack.c.l.b16 %v2564
      %v2645 = vunpack.c.l.b16 %v2565
      %v2646 = vunpack.c.l.b16 %v2566
      %v2647 = vunpack.c.l.b16 %v2567
      %v2648 = vunpack.c.l.b16 %v2568
      %v2649 = vunpack.c.l.b16 %v2569
      %v2650 = vunpack.c.l.b16 %v2570
      %v2651 = vpack.c.b16 %v2636, %v2635
      %v2652 = vpack.c.b16 %v2638, %v2637
      %v2653 = vpack.c.b16 %v2640, %v2639
      %v2654 = vpack.c.b16 %v2642, %v2641
      %v2655 = vpack.c.b16 %v2644, %v2643
      %v2656 = vpack.c.b16 %v2646, %v2645
      %v2657 = vpack.c.b16 %v2648, %v2647
      %v2658 = vpack.c.b16 %v2650, %v2649
      %2667 = vrot.lane.b32.xlu0 %v245, 7
      %v2668 = vpop.permute.xlu0 %2667
      %v2670 = vmul.f32 %v2305, %v2668
      %v2671 = vmul.f32 %v2306, %v2668
      %v2672 = vmul.f32 %v2307, %v2668
      %v2673 = vmul.f32 %v2308, %v2668
      %v2674 = vmul.f32 %v2309, %v2668
      %v2675 = vmul.f32 %v2310, %v2668
      %v2676 = vmul.f32 %v2311, %v2668
      %v2677 = vmul.f32 %v2312, %v2668
      %v2678 = vmul.f32 %v2313, %v2668
      %v2679 = vmul.f32 %v2314, %v2668
      %v2680 = vmul.f32 %v2315, %v2668
      %v2681 = vmul.f32 %v2316, %v2668
      %v2682 = vmul.f32 %v2317, %v2668
      %v2683 = vmul.f32 %v2318, %v2668
      %v2684 = vmul.f32 %v2319, %v2668
      %v2685 = vmul.f32 %v2320, %v2668
      %v2686 = vpack.c.bf16 %v2670, %v2670
      %v2687 = vpack.c.bf16 %v2671, %v2671
      %v2688 = vpack.c.bf16 %v2672, %v2672
      %v2689 = vpack.c.bf16 %v2673, %v2673
      %v2690 = vpack.c.bf16 %v2674, %v2674
      %v2691 = vpack.c.bf16 %v2675, %v2675
      %v2692 = vpack.c.bf16 %v2676, %v2676
      %v2693 = vpack.c.bf16 %v2677, %v2677
      %v2694 = vpack.c.bf16 %v2678, %v2678
      %v2695 = vpack.c.bf16 %v2679, %v2679
      %v2696 = vpack.c.bf16 %v2680, %v2680
      %v2697 = vpack.c.bf16 %v2681, %v2681
      %v2698 = vpack.c.bf16 %v2682, %v2682
      %v2699 = vpack.c.bf16 %v2683, %v2683
      %v2700 = vpack.c.bf16 %v2684, %v2684
      %v2701 = vpack.c.bf16 %v2685, %v2685
      %v2718 = vunpack.c.l.b16 %v2686
      %v2719 = vunpack.c.l.b16 %v2687
      %v2720 = vunpack.c.l.b16 %v2688
      %v2721 = vunpack.c.l.b16 %v2689
      %v2722 = vunpack.c.l.b16 %v2690
      %v2723 = vunpack.c.l.b16 %v2691
      %v2724 = vunpack.c.l.b16 %v2692
      %v2725 = vunpack.c.l.b16 %v2693
      %v2726 = vunpack.c.l.b16 %v2694
      %v2727 = vunpack.c.l.b16 %v2695
      %v2728 = vunpack.c.l.b16 %v2696
      %v2729 = vunpack.c.l.b16 %v2697
      %v2730 = vunpack.c.l.b16 %v2698
      %v2731 = vunpack.c.l.b16 %v2699
      %v2732 = vunpack.c.l.b16 %v2700
      %v2733 = vunpack.c.l.b16 %v2701
      %v2734 = vpack.c.b16 %v2719, %v2718
      %v2735 = vpack.c.b16 %v2721, %v2720
      %v2736 = vpack.c.b16 %v2723, %v2722
      %v2737 = vpack.c.b16 %v2725, %v2724
      %v2738 = vpack.c.b16 %v2727, %v2726
      %v2739 = vpack.c.b16 %v2729, %v2728
      %v2740 = vpack.c.b16 %v2731, %v2730
      %v2741 = vpack.c.b16 %v2733, %v2732
      %2742 = vrot.lane.b32.xlu0 %v2388, 127
      %v2743 = vpop.permute.xlu0 %2742
      %2744 = vrot.lane.b32.xlu0 %v2389, 127
      %v2745 = vpop.permute.xlu0 %2744
      %2746 = vrot.lane.b32.xlu0 %v2390, 127
      %v2747 = vpop.permute.xlu0 %2746
      %2748 = vrot.lane.b32.xlu0 %v2391, 127
      %v2749 = vpop.permute.xlu0 %2748
      %2750 = vrot.lane.b32.xlu0 %v2392, 127
      %v2751 = vpop.permute.xlu0 %2750
      %2752 = vrot.lane.b32.xlu0 %v2393, 127
      %v2753 = vpop.permute.xlu0 %2752
      %2754 = vrot.lane.b32.xlu0 %v2394, 127
      %v2755 = vpop.permute.xlu0 %2754
      %2756 = vrot.lane.b32.xlu0 %v2395, 127
      %v2757 = vpop.permute.xlu0 %2756
      %2758 = vrot.lane.b32.xlu0 %v2734, 121
      %v2759 = vpop.permute.xlu0 %2758
      %2760 = vrot.lane.b32.xlu0 %v2735, 121
      %v2761 = vpop.permute.xlu0 %2760
      %2762 = vrot.lane.b32.xlu0 %v2736, 121
      %v2763 = vpop.permute.xlu0 %2762
      %2764 = vrot.lane.b32.xlu0 %v2737, 121
      %v2765 = vpop.permute.xlu0 %2764
      %2766 = vrot.lane.b32.xlu0 %v2738, 121
      %v2767 = vpop.permute.xlu0 %2766
      %2768 = vrot.lane.b32.xlu0 %v2739, 121
      %v2769 = vpop.permute.xlu0 %2768
      %2770 = vrot.lane.b32.xlu0 %v2740, 121
      %v2771 = vpop.permute.xlu0 %2770
      %2772 = vrot.lane.b32.xlu0 %v2741, 121
      %v2773 = vpop.permute.xlu0 %2772
      %2774 = vrot.lane.b32.xlu0 %v2743, 121
      %v2775 = vpop.permute.xlu0 %2774
      %2776 = vrot.lane.b32.xlu0 %v2745, 121
      %v2777 = vpop.permute.xlu0 %2776
      %2778 = vrot.lane.b32.xlu0 %v2747, 121
      %v2779 = vpop.permute.xlu0 %2778
      %2780 = vrot.lane.b32.xlu0 %v2749, 121
      %v2781 = vpop.permute.xlu0 %2780
      %2782 = vrot.lane.b32.xlu0 %v2751, 121
      %v2783 = vpop.permute.xlu0 %2782
      %2784 = vrot.lane.b32.xlu0 %v2753, 121
      %v2785 = vpop.permute.xlu0 %2784
      %2786 = vrot.lane.b32.xlu0 %v2755, 121
      %v2787 = vpop.permute.xlu0 %2786
      %2788 = vrot.lane.b32.xlu0 %v2757, 121
      %v2789 = vpop.permute.xlu0 %2788
      %2806 = vmatpush.bf16.msra.mxu0 %v2773
      %2807 = vmatpush.bf16.msra.mxu0 %v2771
      %2808 = vmatpush.bf16.msra.mxu0 %v2769
      %2809 = vmatpush.bf16.msra.mxu0 %v2767
      %2810 = vmatpush.bf16.msra.mxu0 %v2765
      %2811 = vmatpush.bf16.msra.mxu0 %v2763
      %2812 = vmatpush.bf16.msra.mxu0 %v2761
      %2813 = vmatpush.bf16.msra.mxu0 %v2759
      %2814 = vmatmul.bf16.gmra.mxu0 %v2603
      %v2815 = vpop.f32.mrf.mxu0
      %v2816 = vadd.f32 0.0, %v2815
      %v2817 = vpop.f32.mrf.mxu0
      %2818 = vmatmul.bf16.gmra.mxu0 %v2604
      %v2819 = vpop.f32.mrf.mxu0
      %v2820 = vpop.f32.mrf.mxu0
      %2821 = vmatmul.bf16.gmra.mxu0 %v2605
      %v2822 = vpop.f32.mrf.mxu0
      %v2823 = vpop.f32.mrf.mxu0
      %2824 = vmatmul.bf16.gmra.mxu0 %v2606
      %v2825 = vpop.f32.mrf.mxu0
      %v2826 = vpop.f32.mrf.mxu0
      %2827 = vmatmul.bf16.gmra.mxu0 %v2607
      %v2828 = vpop.f32.mrf.mxu0
      %v2829 = vpop.f32.mrf.mxu0
      %2830 = vmatmul.bf16.gmra.mxu0 %v2608
      %v2831 = vpop.f32.mrf.mxu0
      %v2832 = vpop.f32.mrf.mxu0
      %2833 = vmatmul.bf16.gmra.mxu0 %v2609
      %v2834 = vpop.f32.mrf.mxu0
      %v2835 = vpop.f32.mrf.mxu0
      %2836 = vmatmul.bf16.gmra.mxu0 %v2610
      %v2837 = vpop.f32.mrf.mxu0
      %v2838 = vpop.f32.mrf.mxu0
      %2839 = vdwg.mxu0
      %2840 = vmatpush.bf16.msra.mxu0 %v2789
      %2841 = vmatpush.bf16.msra.mxu0 %v2787
      %2842 = vmatpush.bf16.msra.mxu0 %v2785
      %2843 = vmatpush.bf16.msra.mxu0 %v2783
      %2844 = vmatpush.bf16.msra.mxu0 %v2781
      %2845 = vmatpush.bf16.msra.mxu0 %v2779
      %2846 = vmatpush.bf16.msra.mxu0 %v2777
      %2847 = vmatpush.bf16.msra.mxu0 %v2775
      %2848 = vmatmul.bf16.gmra.mxu0 %v2651
      %v2849 = vpop.f32.mrf.mxu0
      %v2850 = vadd.f32 %v2816, %v2849
      %v2851 = vpop.f32.mrf.mxu0
      %2852 = vmatmul.bf16.gmra.mxu0 %v2652
      %v2853 = vpop.f32.mrf.mxu0
      %v2854 = vpop.f32.mrf.mxu0
      %2855 = vmatmul.bf16.gmra.mxu0 %v2653
      %v2856 = vpop.f32.mrf.mxu0
      %v2857 = vpop.f32.mrf.mxu0
      %2858 = vmatmul.bf16.gmra.mxu0 %v2654
      %v2859 = vpop.f32.mrf.mxu0
      %v2860 = vpop.f32.mrf.mxu0
      %2861 = vmatmul.bf16.gmra.mxu0 %v2655
      %v2862 = vpop.f32.mrf.mxu0
      %v2863 = vpop.f32.mrf.mxu0
      %2864 = vmatmul.bf16.gmra.mxu0 %v2656
      %v2865 = vpop.f32.mrf.mxu0
      %v2866 = vpop.f32.mrf.mxu0
      %2867 = vmatmul.bf16.gmra.mxu0 %v2657
      %v2868 = vpop.f32.mrf.mxu0
      %v2869 = vpop.f32.mrf.mxu0
      %2870 = vmatmul.bf16.gmra.mxu0 %v2658
      %v2871 = vpop.f32.mrf.mxu0
      %v2872 = vpop.f32.mrf.mxu0
      %2873 = vdwg.mxu0
      %v2874 = vadd.f32 %v2536, %v2850
      %s2875 = scalar_lea.vmem %s3, 512
      %v2876 = vld [vmem:[%s2875] sm:$0xf]
      %v2877 = vld [vmem:[%s2875 + $0x4] sm:$0xf]
      %v2878 = vld [vmem:[%s2875 + $0x8] sm:$0xf]
      %v2879 = vld [vmem:[%s2875 + $0xc] sm:$0xf]
      %v2880 = vld [vmem:[%s2875 + $0x10] sm:$0xf]
      %v2881 = vld [vmem:[%s2875 + $0x14] sm:$0xf]
      %v2882 = vld [vmem:[%s2875 + $0x18] sm:$0xf]
      %v2883 = vld [vmem:[%s2875 + $0x1c] sm:$0xf]
      %v2884 = vld [vmem:[%s2875 + $0x20] sm:$0xf]
      %v2885 = vld [vmem:[%s2875 + $0x24] sm:$0xf]
      %v2886 = vld [vmem:[%s2875 + $0x28] sm:$0xf]
      %v2887 = vld [vmem:[%s2875 + $0x2c] sm:$0xf]
      %v2888 = vld [vmem:[%s2875 + $0x30] sm:$0xf]
      %v2889 = vld [vmem:[%s2875 + $0x34] sm:$0xf]
      %v2890 = vld [vmem:[%s2875 + $0x38] sm:$0xf]
      %v2891 = vld [vmem:[%s2875 + $0x3c] sm:$0xf]
      %2892 = vrot.lane.b32.xlu0 %v248, 9
      %v2893 = vpop.permute.xlu0 %2892
      %v2895 = vmul.f32 %v2305, %v2893
      %v2896 = vmul.f32 %v2306, %v2893
      %v2897 = vmul.f32 %v2307, %v2893
      %v2898 = vmul.f32 %v2308, %v2893
      %v2899 = vmul.f32 %v2309, %v2893
      %v2900 = vmul.f32 %v2310, %v2893
      %v2901 = vmul.f32 %v2311, %v2893
      %v2902 = vmul.f32 %v2312, %v2893
      %v2903 = vmul.f32 %v2313, %v2893
      %v2904 = vmul.f32 %v2314, %v2893
      %v2905 = vmul.f32 %v2315, %v2893
      %v2906 = vmul.f32 %v2316, %v2893
      %v2907 = vmul.f32 %v2317, %v2893
      %v2908 = vmul.f32 %v2318, %v2893
      %v2909 = vmul.f32 %v2319, %v2893
      %v2910 = vmul.f32 %v2320, %v2893
      %v2911 = vpack.c.bf16 %v2896, %v2895
      %v2912 = vpack.c.bf16 %v2898, %v2897
      %v2913 = vpack.c.bf16 %v2900, %v2899
      %v2914 = vpack.c.bf16 %v2902, %v2901
      %v2915 = vpack.c.bf16 %v2904, %v2903
      %v2916 = vpack.c.bf16 %v2906, %v2905
      %v2917 = vpack.c.bf16 %v2908, %v2907
      %v2918 = vpack.c.bf16 %v2910, %v2909
      %v2935 = vunpack.c.l.b16 %v2876
      %v2936 = vunpack.c.l.b16 %v2877
      %v2937 = vunpack.c.l.b16 %v2878
      %v2938 = vunpack.c.l.b16 %v2879
      %v2939 = vunpack.c.l.b16 %v2880
      %v2940 = vunpack.c.l.b16 %v2881
      %v2941 = vunpack.c.l.b16 %v2882
      %v2942 = vunpack.c.l.b16 %v2883
      %v2943 = vunpack.c.l.b16 %v2884
      %v2944 = vunpack.c.l.b16 %v2885
      %v2945 = vunpack.c.l.b16 %v2886
      %v2946 = vunpack.c.l.b16 %v2887
      %v2947 = vunpack.c.l.b16 %v2888
      %v2948 = vunpack.c.l.b16 %v2889
      %v2949 = vunpack.c.l.b16 %v2890
      %v2950 = vunpack.c.l.b16 %v2891
      %v2951 = vpack.c.b16 %v2936, %v2935
      %v2952 = vpack.c.b16 %v2938, %v2937
      %v2953 = vpack.c.b16 %v2940, %v2939
      %v2954 = vpack.c.b16 %v2942, %v2941
      %v2955 = vpack.c.b16 %v2944, %v2943
      %v2956 = vpack.c.b16 %v2946, %v2945
      %v2957 = vpack.c.b16 %v2948, %v2947
      %v2958 = vpack.c.b16 %v2950, %v2949
      %2975 = vrot.lane.b32.xlu0 %v2911, 119
      %v2976 = vpop.permute.xlu0 %2975
      %2977 = vrot.lane.b32.xlu0 %v2912, 119
      %v2978 = vpop.permute.xlu0 %2977
      %2979 = vrot.lane.b32.xlu0 %v2913, 119
      %v2980 = vpop.permute.xlu0 %2979
      %2981 = vrot.lane.b32.xlu0 %v2914, 119
      %v2982 = vpop.permute.xlu0 %2981
      %2983 = vrot.lane.b32.xlu0 %v2915, 119
      %v2984 = vpop.permute.xlu0 %2983
      %2985 = vrot.lane.b32.xlu0 %v2916, 119
      %v2986 = vpop.permute.xlu0 %2985
      %2987 = vrot.lane.b32.xlu0 %v2917, 119
      %v2988 = vpop.permute.xlu0 %2987
      %2989 = vrot.lane.b32.xlu0 %v2918, 119
      %v2990 = vpop.permute.xlu0 %2989
      %2999 = vmatpush.bf16.msra.mxu0 %v2990
      %3000 = vmatpush.bf16.msra.mxu0 %v2988
      %3001 = vmatpush.bf16.msra.mxu0 %v2986
      %3002 = vmatpush.bf16.msra.mxu0 %v2984
      %3003 = vmatpush.bf16.msra.mxu0 %v2982
      %3004 = vmatpush.bf16.msra.mxu0 %v2980
      %3005 = vmatpush.bf16.msra.mxu0 %v2978
      %3006 = vmatpush.bf16.msra.mxu0 %v2976
      %3007 = vmatmul.bf16.gmra.mxu0 %v2951
      %v3008 = vpop.f32.mrf.mxu0
      %v3009 = vadd.f32 0.0, %v3008
      %v3010 = vpop.f32.mrf.mxu0
      %3011 = vmatmul.bf16.gmra.mxu0 %v2952
      %v3012 = vpop.f32.mrf.mxu0
      %v3013 = vpop.f32.mrf.mxu0
      %3014 = vmatmul.bf16.gmra.mxu0 %v2953
      %v3015 = vpop.f32.mrf.mxu0
      %v3016 = vpop.f32.mrf.mxu0
      %3017 = vmatmul.bf16.gmra.mxu0 %v2954
      %v3018 = vpop.f32.mrf.mxu0
      %v3019 = vpop.f32.mrf.mxu0
      %3020 = vmatmul.bf16.gmra.mxu0 %v2955
      %v3021 = vpop.f32.mrf.mxu0
      %v3022 = vpop.f32.mrf.mxu0
      %3023 = vmatmul.bf16.gmra.mxu0 %v2956
      %v3024 = vpop.f32.mrf.mxu0
      %v3025 = vpop.f32.mrf.mxu0
      %3026 = vmatmul.bf16.gmra.mxu0 %v2957
      %v3027 = vpop.f32.mrf.mxu0
      %v3028 = vpop.f32.mrf.mxu0
      %3029 = vmatmul.bf16.gmra.mxu0 %v2958
      %v3030 = vpop.f32.mrf.mxu0
      %v3031 = vpop.f32.mrf.mxu0
      %3032 = vdwg.mxu0
      %v3033 = vadd.f32 %v2874, %v3009
      %v3034 = vld [vmem:[%s4] sm:$0xff]
      %3036 = vset.pattern.permute.xlu0 0
      %3037 = vperm.xlu0 %3036, %v3034
      %v3038 = vpop.permute.xlu0 %3037
      %v3040 = vadd.f32 %v3033, %v3038
      %v3041 = vsel %vm556, %v3040, 0.0
      %3042 = vadd.xlane.f32.xlu0 %v3041
      %v3043 = vpop.xlane.xlu0 %3042
      %v3044 = vmul.f32 %v3043, %v611
      %v3045 = vsub.f32 %v3040, %v3044
      %v3046 = vmul.f32 %v3045, %v3045
      %v3047 = vsel %vm556, %v3046, 0.0
      %3048 = vadd.xlane.f32.xlu0 %v3047
      %v3049 = vpop.xlane.xlu0 %3048
      %v3050 = vmul.f32 %v3049, %v611
      %v3051 = vadd.f32 %v3050, 1e-05
      %v3052 = vrsqrt.pop %v3051
      %v3053 = vmul.f32 %v3052, %v3051
      %v3054 = vmul.f32 %v3053, %v3052
      %v3055 = vmul.f32 0.5, %v3054
      %v3056 = vsub.f32 1.5, %v3055
      %v3057 = vmul.f32 %v3052, %v3056
      %vm3058 = vweird.f32 %v3051
      %vm3059 = vweird.f32 %v3052
      %vm3060 = vmor %vm3058, %vm3059
      %v3061 = vsel %vm3060, %v3052, %v3057
      %v3062 = vmul.f32 %v3045, %v3061
      %vm3063 = vcmp.ge.f32.partialorder %v3062, 0.0
      %v3064 = vmul.f32 %v3062, 0.01
      %v3065 = vsel %vm3063, %v3062, %v3064
      %3066 = vst.msk [vmem:[%s219] sm:$0xff] %vm556, %v3065
      %p3067 = scmp.lt.s32.totalorder %s16, 1
      %s3068 = scalar_select %p3067, %s16, 1
      %s3069 = smul.addr %s3068, 8
      %s3070 = scalar_lea.vmem %s5, %s3069
      // Predicated region
      $region41: #{down_forward.1} parent=39 // pred_check
        %p3071 = pneg %p144
      $region42: #{down_forward.1} parent=39 // pred_check_branch
        %3073 = sbr.rel (%p3071) target = $region44
      $region43: #{down_forward.1} parent=39 // pred_region
        _
      $region44: #{down_forward.1} parent=39 // pred_fallthru
        _
    $region40: #{down_forward.1} parent=5 // pred_fallthru
      _
    %p3074 = scmp.le.s32.totalorder 2, %s11
    // Predicated region
    $region45: #{down_forward.1} parent=5 // pred_check
      %p3075 = pneg %p3074
    $region46: #{down_forward.1} parent=5 // pred_check_branch
      %3077 = sbr.rel (%p3075) target = $region48
    $region47: #{down_forward.1} parent=5 // pred_region
      %s3078 = ssub.s32 %s11, 2
      // Predicated region
      $region49: #{down_forward.1} parent=47 // pred_check
        %p3079 = pneg %p150
      $region50: #{down_forward.1} parent=47 // pred_check_branch
        %3081 = sbr.rel (%p3079) target = $region52
      $region51: #{down_forward.1} parent=47 // pred_region
        %p3082 = scmp.lt.s32.totalorder %s17, 1
        %s3083 = scalar_select %p3082, %s17, 1
        %s3084 = smul.addr %s3083, 8
        %s3085 = scalar_lea.vmem %s5, %s3084
      $region52: #{down_forward.1} parent=47 // pred_fallthru
        _
    $region48: #{down_forward.1} parent=5 // pred_fallthru
      _
  $region6: #{down_forward.1} parent=0 // loop_footer
    %s15 = sadd.s32 1, %s11
  $region7: #{down_forward.1} parent=0 // loop_footer_branch
    %10 = sbr.rel target = $region3
  $region8: #{down_forward.1} parent=0 // loop_exit
    _

</llo_original>
